<compile_context>
chip_gen: v6e
topology: v6e:2x2x1
jax: 0.10.0
libtpu: 0.0.40
codegen_flags: <defaults>
</compile_context>

<pallas_src>
from functools import partial

import jax
import jax.numpy as jnp
from jax.experimental import pallas as pl
from jax.experimental.pallas import tpu as pltpu

EPS = 1e-5      # nn.LayerNorm default eps
TAU = 2.0       # MultiStepLIFNode default tau
V_TH = 1.0      # default v_threshold (v_reset = 0.0, decay_input=True, hard reset)
INV_TAU = 1.0 / TAU


def _layernorm(x, g, b):
    mu = jnp.mean(x, axis=-1, keepdims=True)
    var = jnp.mean((x - mu) ** 2, axis=-1, keepdims=True)
    return (x - mu) * jax.lax.rsqrt(var + EPS) * g + b


def spike_block_kernel(x_ref,
                       g1_ref, be1_ref,
                       wqkv_ref, bqkv_ref,
                       wo_ref, bo_ref,
                       g2_ref, be2_ref,
                       w1_ref, bb1_ref, w2_ref, bb2_ref,
                       o_ref,
                       v1_ref, v2_ref,
                       *, num_heads, seq_len, time_block, compute_dtype,
                       approx_recip):
    t = pl.program_id(0)

    # Fresh neuron state at the start of the sequence (membrane = v_reset = 0).
    @pl.when(t == 0)
    def _():
        v1_ref[...] = jnp.zeros_like(v1_ref)
        v2_ref[...] = jnp.zeros_like(v2_ref)

    S = seq_len
    Tb = time_block
    H = num_heads

    x2 = x_ref[...].astype(jnp.float32)          # (N, E) with N = Tb * S
    N, E = x2.shape
    D = E // H
    scale = 1.0 / (D ** 0.5)

    def cast(z):
        return z.astype(compute_dtype)

    def recip(z):
        if approx_recip:
            return pl.reciprocal(z, approx=True)   # EUP slot, otherwise idle here
        return 1.0 / z

    # ---------------- norm1 + fused QKV projection (batched over Tb*S rows) ---
    xn = _layernorm(x2, g1_ref[...], be1_ref[...])
    qkv = jnp.dot(cast(xn), cast(wqkv_ref[...]),
                  preferred_element_type=jnp.float32) + bqkv_ref[...]
    q = qkv[:, 0 * E:1 * E]
    k = qkv[:, 1 * E:2 * E]
    v = qkv[:, 2 * E:3 * E]

    # ------------- multi-head attention: ONE batched dot over (H*Tb, S, D) ----
    def to_heads(z):                               # (N, E) -> (H*Tb, S, D)
        return jnp.concatenate(
            [z[:, h * D:(h + 1) * D].reshape(Tb, S, D) for h in range(H)],
            axis=0)

    qb = to_heads(q)
    kb = to_heads(k)
    vb = to_heads(v)

    sc = jax.lax.dot_general(cast(qb), cast(kb),
                             (((2,), (2,)), ((0,), (0,))),
                             preferred_element_type=jnp.float32) * scale  # (H*Tb,S,S)
    sc = sc - jnp.max(sc, axis=-1, keepdims=True)
    p = jnp.exp(sc)
    p = p * recip(jnp.sum(p, axis=-1, keepdims=True))
    ctx_b = jax.lax.dot_general(cast(p), cast(vb),
                                (((2,), (1,)), ((0,), (0,))),
                                preferred_element_type=jnp.float32)       # (H*Tb,S,D)
    ctx = jnp.concatenate(
        [ctx_b[h * Tb:(h + 1) * Tb].reshape(N, D) for h in range(H)],
        axis=-1)                                                          # (N, E)
    attn = jnp.dot(cast(ctx), cast(wo_ref[...]),
                   preferred_element_type=jnp.float32) + bo_ref[...]

    pre1 = attn + x2                               # residual, (N, E)

    # ---------------- LIF 1: sequential over Tb (elementwise only) ------------
    v1 = v1_ref[...]
    spikes1 = []
    for i in range(Tb):                            # static unroll, Tb is small
        v1 = v1 + (pre1[i * S:(i + 1) * S, :] - v1) * INV_TAU
        spk = (v1 >= V_TH).astype(jnp.float32)
        v1 = jnp.where(spk > 0, 0.0, v1)           # hard reset to 0
        spikes1.append(spk)
    v1_ref[...] = v1
    spk1 = jnp.concatenate(spikes1, axis=0)        # (N, E)

    # ---------------- norm2 + MLP (batched over Tb*S rows) --------------------
    yn = _layernorm(spk1, g2_ref[...], be2_ref[...])
    h1 = jnp.maximum(
        jnp.dot(cast(yn), cast(w1_ref[...]),
                preferred_element_type=jnp.float32) + bb1_ref[...], 0.0)
    mlp = jnp.dot(cast(h1), cast(w2_ref[...]),
                  preferred_element_type=jnp.float32) + bb2_ref[...]
    pre2 = mlp + spk1

    # ---------------- LIF 2: sequential over Tb -------------------------------
    v2 = v2_ref[...]
    spikes2 = []
    for i in range(Tb):
        v2 = v2 + (pre2[i * S:(i + 1) * S, :] - v2) * INV_TAU
        spk = (v2 >= V_TH).astype(jnp.float32)
        v2 = jnp.where(spk > 0, 0.0, v2)
        spikes2.append(spk)
    v2_ref[...] = v2

    o_ref[...] = jnp.concatenate(spikes2, axis=0).astype(o_ref.dtype)
    # NOTE: surrogate.Sigmoid() / detach_reset only shape the backward pass; the
    # forward is the heaviside spike implemented above.


def spike_transformer_block(x, params, num_heads, *, max_time_block=8,
                            compute_dtype=jnp.float32, approx_recip=False):
    B, S, E = x.shape
    M = params["w1"].shape[1]

    # Tb = largest divisor of B that is <= max_time_block (time axis blocking).
    Tb = 1
    for c in range(1, min(B, max_time_block) + 1):
        if B % c == 0:
            Tb = c
    N = Tb * S

    # Fuse the QKV projection weights/biases into a single (E, 3E) matmul.
    wqkv = jnp.concatenate([params["wq"], params["wk"], params["wv"]], axis=1)
    bqkv = jnp.concatenate([params["bq"], params["bk"], params["bv"]], axis=1)

    # In fast mode, store weight matrices as bf16 (halves their DMA bytes);
    # biases / LN params stay f32 (added post-accumulation).
    wqkv_c = wqkv.astype(compute_dtype)
    wo_c = params["wo"].astype(compute_dtype)
    w1_c = params["w1"].astype(compute_dtype)
    w2_c = params["w2"].astype(compute_dtype)

    # Flat (B*S, E) activation slab; the grid walks Tb-timestep blocks of it.
    x2 = x.reshape(B * S, E)

    def const_spec(shape):
        return pl.BlockSpec(shape, lambda t, _s=shape: (0,) * len(_s))

    in_specs = [
        pl.BlockSpec((N, E), lambda t: (t, 0)),            # x block (Tb*S, E)
        const_spec((1, E)), const_spec((1, E)),            # norm1 gamma/beta
        const_spec((E, 3 * E)), const_spec((1, 3 * E)),    # fused Wqkv, bqkv
        const_spec((E, E)), const_spec((1, E)),            # Wo, bo
        const_spec((1, E)), const_spec((1, E)),            # norm2 gamma/beta
        const_spec((E, M)), const_spec((1, M)),            # fc1
        const_spec((M, E)), const_spec((1, E)),            # fc2
    ]

    kernel = partial(spike_block_kernel,
                     num_heads=num_heads, seq_len=S, time_block=Tb,
                     compute_dtype=compute_dtype, approx_recip=approx_recip)

    out2 = pl.pallas_call(
        kernel,
        out_shape=jax.ShapeDtypeStruct((B * S, E), jnp.float32),
        grid_spec=pltpu.PrefetchScalarGridSpec(
            num_scalar_prefetch=0,
            grid=(B // Tb,),
            in_specs=in_specs,
            out_specs=pl.BlockSpec((N, E), lambda t: (t, 0)),
            scratch_shapes=[pltpu.VMEM((S, E), jnp.float32),   # LIF1 membrane
                            pltpu.VMEM((S, E), jnp.float32)],  # LIF2 membrane
        ),
        compiler_params=pltpu.CompilerParams(
            # LIF state carries across time blocks -> sequential grid axis.
            dimension_semantics=("arbitrary",),
            # Tiny at these shapes; raise for realistic E/M (esp. on v7x).
            vmem_limit_bytes=32 * 1024 * 1024,
        ),
    )(x2,
      params["g1"], params["be1"],
      wqkv_c, bqkv,
      wo_c, params["bo"],
      params["g2"], params["be2"],
      w1_c, params["bb1"], w2_c, params["bb2"])

    return out2.reshape(B, S, E)


# ------------------------ pure-JAX reference (for checking) -------------------
def reference(x, params, num_heads):
    B, S, E = x.shape
    D = E // num_heads

    def ln(z, g, b):
        mu = z.mean(-1, keepdims=True)
        var = ((z - mu) ** 2).mean(-1, keepdims=True)
        return (z - mu) / jnp.sqrt(var + EPS) * g + b

    xn = ln(x, params["g1"], params["be1"])
    q = xn @ params["wq"] + params["bq"]
    k = xn @ params["wk"] + params["bk"]
    v = xn @ params["wv"] + params["bv"]
    q = q.reshape(B, S, num_heads, D).transpose(0, 2, 1, 3)
    k = k.reshape(B, S, num_heads, D).transpose(0, 2, 1, 3)
    v = v.reshape(B, S, num_heads, D).transpose(0, 2, 1, 3)
    s = jnp.einsum("bhqd,bhkd->bhqk", q, k) / jnp.sqrt(D)
    p = jax.nn.softmax(s, axis=-1)
    ctx = jnp.einsum("bhqk,bhkd->bhqd", p, v).transpose(0, 2, 1, 3).reshape(B, S, E)
    attn = ctx @ params["wo"] + params["bo"]

    def lif(seq):  # seq: (T, S, E), T == batch axis is the LIF time axis
        def step(vm, xt):
            vm = vm + (xt - vm) / TAU
            spk = (vm >= V_TH).astype(jnp.float32)
            vm = jnp.where(spk > 0, 0.0, vm)
            return vm, spk
        _, out = jax.lax.scan(step, jnp.zeros(seq.shape[1:], jnp.float32), seq)
        return out

    spk1 = lif(attn + x)
    yn = ln(spk1, params["g2"], params["be2"])
    h = jax.nn.relu(yn @ params["w1"] + params["bb1"])
    h = h @ params["w2"] + params["bb2"]
    return lif(h + spk1)


if __name__ == "__main__":
    B, S, E, H, M = 2, 8, 32, 4, 64   # batch(=LIF time), seq, embed_dim, heads, mlp_dim

    key = jax.random.PRNGKey(0)
    ks = jax.random.split(key, 16)

    def w(k, shape, s=0.1):
        return jax.random.normal(k, shape, jnp.float32) * s

    params = {
        "g1": jnp.ones((1, E), jnp.float32), "be1": jnp.zeros((1, E), jnp.float32),
        "wq": w(ks[0], (E, E)), "bq": w(ks[1], (1, E), 0.02),
        "wk": w(ks[2], (E, E)), "bk": w(ks[3], (1, E), 0.02),
        "wv": w(ks[4], (E, E)), "bv": w(ks[5], (1, E), 0.02),
        "wo": w(ks[6], (E, E)), "bo": w(ks[7], (1, E), 0.02),
        "g2": jnp.ones((1, E), jnp.float32), "be2": jnp.zeros((1, E), jnp.float32),
        "w1": w(ks[8], (E, M)), "bb1": w(ks[9], (1, M), 0.02),
        "w2": w(ks[10], (M, E)), "bb2": w(ks[11], (1, E), 0.02),
    }

    x = jax.random.normal(ks[12], (B, S, E), jnp.float32)

    # Precise mode (f32 MXU, exact reciprocal): must match the f32 reference.
    out = spike_transformer_block(x, params, num_heads=H)
    out = jax.block_until_ready(out)

    ref = reference(x, params, num_heads=H)
    assert out.shape == (B, S, E)
    assert jnp.allclose(out, ref, atol=1e-5), float(jnp.max(jnp.abs(out - ref)))

    # Fast mode (bf16 MXU operands + EUP approx reciprocal); spikes near the
    # threshold may flip vs. the f32 reference, so only sanity-check the output.
    out_fast = spike_transformer_block(x, params, num_heads=H,
                                       compute_dtype=jnp.bfloat16,
                                       approx_recip=True)
    out_fast = jax.block_until_ready(out_fast)
    assert out_fast.shape == (B, S, E)
    assert bool(jnp.all((out_fast == 0.0) | (out_fast == 1.0)))

    print("KERNEL_OK")
</pallas_src>

<mosaic_0001>
module attributes {stable_mosaic.version = 11 : i64} {
  func.func @spike_block_kernel(%arg0: i32, %arg1: memref<16x32xf32, #tpu.memory_space<vmem>>, %arg2: memref<1x32xf32, #tpu.memory_space<vmem>>, %arg3: memref<1x32xf32, #tpu.memory_space<vmem>>, %arg4: memref<32x96xf32, #tpu.memory_space<vmem>>, %arg5: memref<1x96xf32, #tpu.memory_space<vmem>>, %arg6: memref<32x32xf32, #tpu.memory_space<vmem>>, %arg7: memref<1x32xf32, #tpu.memory_space<vmem>>, %arg8: memref<1x32xf32, #tpu.memory_space<vmem>>, %arg9: memref<1x32xf32, #tpu.memory_space<vmem>>, %arg10: memref<32x64xf32, #tpu.memory_space<vmem>>, %arg11: memref<1x64xf32, #tpu.memory_space<vmem>>, %arg12: memref<64x32xf32, #tpu.memory_space<vmem>>, %arg13: memref<1x32xf32, #tpu.memory_space<vmem>>, %arg14: memref<16x32xf32, #tpu.memory_space<vmem>>, %arg15: memref<8x32xf32, #tpu.memory_space<vmem>>, %arg16: memref<8x32xf32, #tpu.memory_space<vmem>>) attributes {dimension_semantics = [#tpu.dimension_semantics<arbitrary>], iteration_bounds = array<i64: 1>, scalar_prefetch = 0 : i64, scratch_operands = 2 : i64, tpu.core_type = #tpu.core_type<tc>, window_params = [{transform_indices = @transform_0, window_bounds = array<i64: 16, 32>}, {pipeline_mode = #tpu.pipeline_mode<synchronous>, transform_indices = @transform_1, window_bounds = array<i64: 1, 32>}, {pipeline_mode = #tpu.pipeline_mode<synchronous>, transform_indices = @transform_2, window_bounds = array<i64: 1, 32>}, {pipeline_mode = #tpu.pipeline_mode<synchronous>, transform_indices = @transform_3, window_bounds = array<i64: 32, 96>}, {pipeline_mode = #tpu.pipeline_mode<synchronous>, transform_indices = @transform_4, window_bounds = array<i64: 1, 96>}, {pipeline_mode = #tpu.pipeline_mode<synchronous>, transform_indices = @transform_5, window_bounds = array<i64: 32, 32>}, {pipeline_mode = #tpu.pipeline_mode<synchronous>, transform_indices = @transform_6, window_bounds = array<i64: 1, 32>}, {pipeline_mode = #tpu.pipeline_mode<synchronous>, transform_indices = @transform_7, window_bounds = array<i64: 1, 32>}, {pipeline_mode = #tpu.pipeline_mode<synchronous>, transform_indices = @transform_8, window_bounds = array<i64: 1, 32>}, {pipeline_mode = #tpu.pipeline_mode<synchronous>, transform_indices = @transform_9, window_bounds = array<i64: 32, 64>}, {pipeline_mode = #tpu.pipeline_mode<synchronous>, transform_indices = @transform_10, window_bounds = array<i64: 1, 64>}, {pipeline_mode = #tpu.pipeline_mode<synchronous>, transform_indices = @transform_11, window_bounds = array<i64: 64, 32>}, {pipeline_mode = #tpu.pipeline_mode<synchronous>, transform_indices = @transform_12, window_bounds = array<i64: 1, 32>}, {transform_indices = @transform_13, window_bounds = array<i64: 16, 32>}]} {
    %c0_i32 = arith.constant 0 : i32
    %0 = arith.cmpi eq, %arg0, %c0_i32 : i32
    %1 = arith.extui %0 : i1 to i32
    %c0_i32_0 = arith.constant 0 : i32
    %2 = arith.cmpi ne, %1, %c0_i32_0 : i32
    scf.if %2 {
      %cst_72 = arith.constant 0.000000e+00 : f32
      %189 = vector.broadcast %cst_72 : f32 to vector<8x32xf32>
      %c0_73 = arith.constant 0 : index
      %c0_74 = arith.constant 0 : index
      %190 = vector.load %arg15[%c0_73, %c0_74] : memref<8x32xf32, #tpu.memory_space<vmem>>, vector<8x32xf32>
      tpu.vector_store %arg15[%c0_73, %c0_74], %189 {strides = array<i32>} : memref<8x32xf32, #tpu.memory_space<vmem>>, vector<8x32xf32>,
      %cst_75 = arith.constant 0.000000e+00 : f32
      %191 = vector.broadcast %cst_75 : f32 to vector<8x32xf32>
      %c0_76 = arith.constant 0 : index
      %c0_77 = arith.constant 0 : index
      %192 = vector.load %arg16[%c0_76, %c0_77] : memref<8x32xf32, #tpu.memory_space<vmem>>, vector<8x32xf32>
      tpu.vector_store %arg16[%c0_76, %c0_77], %191 {strides = array<i32>} : memref<8x32xf32, #tpu.memory_space<vmem>>, vector<8x32xf32>,
    } else {
    }
    %c0 = arith.constant 0 : index
    %c0_1 = arith.constant 0 : index
    %3 = vector.load %arg1[%c0, %c0_1] : memref<16x32xf32, #tpu.memory_space<vmem>>, vector<16x32xf32>
    %c0_2 = arith.constant 0 : index
    %c0_3 = arith.constant 0 : index
    %4 = vector.load %arg2[%c0_2, %c0_3] : memref<1x32xf32, #tpu.memory_space<vmem>>, vector<1x32xf32>
    %c0_4 = arith.constant 0 : index
    %c0_5 = arith.constant 0 : index
    %5 = vector.load %arg3[%c0_4, %c0_5] : memref<1x32xf32, #tpu.memory_space<vmem>>, vector<1x32xf32>
    %cst = arith.constant dense<0.000000e+00> : vector<16xf32>
    %6 = vector.multi_reduction <add>, %3, %cst [1] : vector<16x32xf32> to vector<16xf32>
    %7 = vector.shape_cast %6 : vector<16xf32> to vector<16x1xf32>
    %cst_6 = arith.constant 3.200000e+01 : f32
    %8 = vector.broadcast %cst_6 : f32 to vector<16x1xf32>
    %9 = arith.divf %7, %8 : vector<16x1xf32>
    %10 = vector.broadcast %9 : vector<16x1xf32> to vector<16x32xf32>
    %11 = arith.subf %3, %10 : vector<16x32xf32>
    %12 = arith.mulf %11, %11 : vector<16x32xf32>
    %cst_7 = arith.constant dense<0.000000e+00> : vector<16xf32>
    %13 = vector.multi_reduction <add>, %12, %cst_7 [1] : vector<16x32xf32> to vector<16xf32>
    %14 = vector.shape_cast %13 : vector<16xf32> to vector<16x1xf32>
    %cst_8 = arith.constant 3.200000e+01 : f32
    %15 = vector.broadcast %cst_8 : f32 to vector<16x1xf32>
    %16 = arith.divf %14, %15 : vector<16x1xf32>
    %17 = vector.broadcast %9 : vector<16x1xf32> to vector<16x32xf32>
    %18 = arith.subf %3, %17 : vector<16x32xf32>
    %cst_9 = arith.constant 9.99999974E-6 : f32
    %19 = vector.broadcast %cst_9 : f32 to vector<16x1xf32>
    %20 = arith.addf %16, %19 : vector<16x1xf32>
    %21 = math.rsqrt %20 : vector<16x1xf32>
    %22 = vector.broadcast %21 : vector<16x1xf32> to vector<16x32xf32>
    %23 = arith.mulf %18, %22 : vector<16x32xf32>
    %24 = vector.broadcast %4 : vector<1x32xf32> to vector<16x32xf32>
    %25 = arith.mulf %23, %24 : vector<16x32xf32>
    %26 = vector.broadcast %5 : vector<1x32xf32> to vector<16x32xf32>
    %27 = arith.addf %25, %26 : vector<16x32xf32>
    %c0_10 = arith.constant 0 : index
    %c0_11 = arith.constant 0 : index
    %28 = vector.load %arg4[%c0_10, %c0_11] : memref<32x96xf32, #tpu.memory_space<vmem>>, vector<32x96xf32>
    %cst_12 = arith.constant dense<0.000000e+00> : vector<16x96xf32>
    %29 = tpu.matmul %27, %28, %cst_12 {dimension_numbers = #tpu.dot_dimension_numbers<[1], [0], [0], [1], [0, 0, 1, 1], [], []>} : vector<16x32xf32>, vector<32x96xf32>, vector<16x96xf32> -> vector<16x96xf32>
    %c0_13 = arith.constant 0 : index
    %c0_14 = arith.constant 0 : index
    %30 = vector.load %arg5[%c0_13, %c0_14] : memref<1x96xf32, #tpu.memory_space<vmem>>, vector<1x96xf32>
    %31 = vector.broadcast %30 : vector<1x96xf32> to vector<16x96xf32>
    %32 = arith.addf %29, %31 : vector<16x96xf32>
    %33 = vector.extract_strided_slice %32 {offsets = [0, 0], sizes = [16, 32], strides = [1, 1]} : vector<16x96xf32> to vector<16x32xf32>
    %34 = vector.extract_strided_slice %32 {offsets = [0, 32], sizes = [16, 32], strides = [1, 1]} : vector<16x96xf32> to vector<16x32xf32>
    %35 = vector.extract_strided_slice %32 {offsets = [0, 64], sizes = [16, 32], strides = [1, 1]} : vector<16x96xf32> to vector<16x32xf32>
    %36 = vector.extract_strided_slice %33 {offsets = [0, 0], sizes = [16, 8], strides = [1, 1]} : vector<16x32xf32> to vector<16x8xf32>
    %37 = vector.shape_cast %36 : vector<16x8xf32> to vector<2x8x8xf32>
    %38 = vector.extract_strided_slice %33 {offsets = [0, 8], sizes = [16, 8], strides = [1, 1]} : vector<16x32xf32> to vector<16x8xf32>
    %39 = vector.shape_cast %38 : vector<16x8xf32> to vector<2x8x8xf32>
    %40 = vector.extract_strided_slice %33 {offsets = [0, 16], sizes = [16, 8], strides = [1, 1]} : vector<16x32xf32> to vector<16x8xf32>
    %41 = vector.shape_cast %40 : vector<16x8xf32> to vector<2x8x8xf32>
    %42 = vector.extract_strided_slice %33 {offsets = [0, 24], sizes = [16, 8], strides = [1, 1]} : vector<16x32xf32> to vector<16x8xf32>
    %43 = vector.shape_cast %42 : vector<16x8xf32> to vector<2x8x8xf32>
    %44 = tpu.concatenate %37, %39, %41, %43 in 0 : vector<2x8x8xf32>, vector<2x8x8xf32>, vector<2x8x8xf32>, vector<2x8x8xf32> -> vector<8x8x8xf32>
    %45 = vector.extract_strided_slice %34 {offsets = [0, 0], sizes = [16, 8], strides = [1, 1]} : vector<16x32xf32> to vector<16x8xf32>
    %46 = vector.shape_cast %45 : vector<16x8xf32> to vector<2x8x8xf32>
    %47 = vector.extract_strided_slice %34 {offsets = [0, 8], sizes = [16, 8], strides = [1, 1]} : vector<16x32xf32> to vector<16x8xf32>
    %48 = vector.shape_cast %47 : vector<16x8xf32> to vector<2x8x8xf32>
    %49 = vector.extract_strided_slice %34 {offsets = [0, 16], sizes = [16, 8], strides = [1, 1]} : vector<16x32xf32> to vector<16x8xf32>
    %50 = vector.shape_cast %49 : vector<16x8xf32> to vector<2x8x8xf32>
    %51 = vector.extract_strided_slice %34 {offsets = [0, 24], sizes = [16, 8], strides = [1, 1]} : vector<16x32xf32> to vector<16x8xf32>
    %52 = vector.shape_cast %51 : vector<16x8xf32> to vector<2x8x8xf32>
    %53 = tpu.concatenate %46, %48, %50, %52 in 0 : vector<2x8x8xf32>, vector<2x8x8xf32>, vector<2x8x8xf32>, vector<2x8x8xf32> -> vector<8x8x8xf32>
    %54 = vector.extract_strided_slice %35 {offsets = [0, 0], sizes = [16, 8], strides = [1, 1]} : vector<16x32xf32> to vector<16x8xf32>
    %55 = vector.shape_cast %54 : vector<16x8xf32> to vector<2x8x8xf32>
    %56 = vector.extract_strided_slice %35 {offsets = [0, 8], sizes = [16, 8], strides = [1, 1]} : vector<16x32xf32> to vector<16x8xf32>
    %57 = vector.shape_cast %56 : vector<16x8xf32> to vector<2x8x8xf32>
    %58 = vector.extract_strided_slice %35 {offsets = [0, 16], sizes = [16, 8], strides = [1, 1]} : vector<16x32xf32> to vector<16x8xf32>
    %59 = vector.shape_cast %58 : vector<16x8xf32> to vector<2x8x8xf32>
    %60 = vector.extract_strided_slice %35 {offsets = [0, 24], sizes = [16, 8], strides = [1, 1]} : vector<16x32xf32> to vector<16x8xf32>
    %61 = vector.shape_cast %60 : vector<16x8xf32> to vector<2x8x8xf32>
    %62 = tpu.concatenate %55, %57, %59, %61 in 0 : vector<2x8x8xf32>, vector<2x8x8xf32>, vector<2x8x8xf32>, vector<2x8x8xf32> -> vector<8x8x8xf32>
    %cst_15 = arith.constant dense<0.000000e+00> : vector<8x8x8xf32>
    %63 = tpu.matmul %44, %53, %cst_15 {dimension_numbers = #tpu.dot_dimension_numbers<[2], [2], [1], [1], [0, 0, 0, 1, 1, 1], [0], [0]>} : vector<8x8x8xf32>, vector<8x8x8xf32>, vector<8x8x8xf32> -> vector<8x8x8xf32>
    %cst_16 = arith.constant 0.353553385 : f32
    %64 = vector.broadcast %cst_16 : f32 to vector<8x8x8xf32>
    %65 = arith.mulf %63, %64 : vector<8x8x8xf32>
    %cst_17 = arith.constant dense<0xFF800000> : vector<8x8xf32>
    %66 = vector.multi_reduction <maximumf>, %65, %cst_17 [2] : vector<8x8x8xf32> to vector<8x8xf32>
    %67 = vector.shape_cast %66 : vector<8x8xf32> to vector<8x8x1xf32>
    %68 = vector.broadcast %67 : vector<8x8x1xf32> to vector<8x8x8xf32>
    %69 = arith.subf %65, %68 : vector<8x8x8xf32>
    %70 = math.exp %69 : vector<8x8x8xf32>
    %cst_18 = arith.constant dense<0.000000e+00> : vector<8x8xf32>
    %71 = vector.multi_reduction <add>, %70, %cst_18 [2] : vector<8x8x8xf32> to vector<8x8xf32>
    %72 = vector.shape_cast %71 : vector<8x8xf32> to vector<8x8x1xf32>
    %cst_19 = arith.constant 1.000000e+00 : f32
    %73 = vector.broadcast %cst_19 : f32 to vector<8x8x1xf32>
    %74 = arith.divf %73, %72 : vector<8x8x1xf32>
    %75 = vector.broadcast %74 : vector<8x8x1xf32> to vector<8x8x8xf32>
    %76 = arith.mulf %70, %75 : vector<8x8x8xf32>
    %cst_20 = arith.constant dense<0.000000e+00> : vector<8x8x8xf32>
    %77 = tpu.matmul %76, %62, %cst_20 {dimension_numbers = #tpu.dot_dimension_numbers<[2], [1], [1], [2], [0, 0, 0, 1, 1, 2], [0], [0]>} : vector<8x8x8xf32>, vector<8x8x8xf32>, vector<8x8x8xf32> -> vector<8x8x8xf32>
    %78 = vector.extract_strided_slice %77 {offsets = [0, 0, 0], sizes = [2, 8, 8], strides = [1, 1, 1]} : vector<8x8x8xf32> to vector<2x8x8xf32>
    %79 = vector.shape_cast %78 : vector<2x8x8xf32> to vector<16x8xf32>
    %80 = vector.extract_strided_slice %77 {offsets = [2, 0, 0], sizes = [2, 8, 8], strides = [1, 1, 1]} : vector<8x8x8xf32> to vector<2x8x8xf32>
    %81 = vector.shape_cast %80 : vector<2x8x8xf32> to vector<16x8xf32>
    %82 = vector.extract_strided_slice %77 {offsets = [4, 0, 0], sizes = [2, 8, 8], strides = [1, 1, 1]} : vector<8x8x8xf32> to vector<2x8x8xf32>
    %83 = vector.shape_cast %82 : vector<2x8x8xf32> to vector<16x8xf32>
    %84 = vector.extract_strided_slice %77 {offsets = [6, 0, 0], sizes = [2, 8, 8], strides = [1, 1, 1]} : vector<8x8x8xf32> to vector<2x8x8xf32>
    %85 = vector.shape_cast %84 : vector<2x8x8xf32> to vector<16x8xf32>
    %86 = tpu.concatenate %79, %81, %83, %85 in 1 : vector<16x8xf32>, vector<16x8xf32>, vector<16x8xf32>, vector<16x8xf32> -> vector<16x32xf32>
    %c0_21 = arith.constant 0 : index
    %c0_22 = arith.constant 0 : index
    %87 = vector.load %arg6[%c0_21, %c0_22] : memref<32x32xf32, #tpu.memory_space<vmem>>, vector<32x32xf32>
    %cst_23 = arith.constant dense<0.000000e+00> : vector<16x32xf32>
    %88 = tpu.matmul %86, %87, %cst_23 {dimension_numbers = #tpu.dot_dimension_numbers<[1], [0], [0], [1], [0, 0, 1, 1], [], []>} : vector<16x32xf32>, vector<32x32xf32>, vector<16x32xf32> -> vector<16x32xf32>
    %c0_24 = arith.constant 0 : index
    %c0_25 = arith.constant 0 : index
    %89 = vector.load %arg7[%c0_24, %c0_25] : memref<1x32xf32, #tpu.memory_space<vmem>>, vector<1x32xf32>
    %90 = vector.broadcast %89 : vector<1x32xf32> to vector<16x32xf32>
    %91 = arith.addf %88, %90 : vector<16x32xf32>
    %92 = arith.addf %91, %3 : vector<16x32xf32>
    %c0_26 = arith.constant 0 : index
    %c0_27 = arith.constant 0 : index
    %93 = vector.load %arg15[%c0_26, %c0_27] : memref<8x32xf32, #tpu.memory_space<vmem>>, vector<8x32xf32>
    %94 = vector.extract_strided_slice %92 {offsets = [0, 0], sizes = [8, 32], strides = [1, 1]} : vector<16x32xf32> to vector<8x32xf32>
    %95 = arith.subf %94, %93 : vector<8x32xf32>
    %cst_28 = arith.constant 5.000000e-01 : f32
    %96 = vector.broadcast %cst_28 : f32 to vector<8x32xf32>
    %97 = arith.mulf %95, %96 : vector<8x32xf32>
    %98 = arith.addf %93, %97 : vector<8x32xf32>
    %cst_29 = arith.constant 1.000000e+00 : f32
    %99 = vector.broadcast %cst_29 : f32 to vector<8x32xf32>
    %100 = arith.cmpf oge, %98, %99 : vector<8x32xf32>
    %101 = arith.extui %100 : vector<8x32xi1> to vector<8x32xi32>
    %102 = arith.sitofp %101 : vector<8x32xi32> to vector<8x32xf32>
    %cst_30 = arith.constant 0.000000e+00 : f32
    %103 = vector.broadcast %cst_30 : f32 to vector<8x32xf32>
    %104 = arith.cmpf ogt, %102, %103 : vector<8x32xf32>
    %cst_31 = arith.constant 0.000000e+00 : f32
    %105 = vector.broadcast %cst_31 : f32 to vector<8x32xf32>
    %106 = arith.select %104, %105, %98 : vector<8x32xi1>, vector<8x32xf32>
    %107 = vector.extract_strided_slice %92 {offsets = [8, 0], sizes = [8, 32], strides = [1, 1]} : vector<16x32xf32> to vector<8x32xf32>
    %108 = arith.subf %107, %106 : vector<8x32xf32>
    %cst_32 = arith.constant 5.000000e-01 : f32
    %109 = vector.broadcast %cst_32 : f32 to vector<8x32xf32>
    %110 = arith.mulf %108, %109 : vector<8x32xf32>
    %111 = arith.addf %106, %110 : vector<8x32xf32>
    %cst_33 = arith.constant 1.000000e+00 : f32
    %112 = vector.broadcast %cst_33 : f32 to vector<8x32xf32>
    %113 = arith.cmpf oge, %111, %112 : vector<8x32xf32>
    %114 = arith.extui %113 : vector<8x32xi1> to vector<8x32xi32>
    %115 = arith.sitofp %114 : vector<8x32xi32> to vector<8x32xf32>
    %cst_34 = arith.constant 0.000000e+00 : f32
    %116 = vector.broadcast %cst_34 : f32 to vector<8x32xf32>
    %117 = arith.cmpf ogt, %115, %116 : vector<8x32xf32>
    %cst_35 = arith.constant 0.000000e+00 : f32
    %118 = vector.broadcast %cst_35 : f32 to vector<8x32xf32>
    %119 = arith.select %117, %118, %111 : vector<8x32xi1>, vector<8x32xf32>
    %c0_36 = arith.constant 0 : index
    %c0_37 = arith.constant 0 : index
    %120 = vector.load %arg15[%c0_36, %c0_37] : memref<8x32xf32, #tpu.memory_space<vmem>>, vector<8x32xf32>
    tpu.vector_store %arg15[%c0_36, %c0_37], %119 {strides = array<i32>} : memref<8x32xf32, #tpu.memory_space<vmem>>, vector<8x32xf32>,
    %121 = tpu.concatenate %102, %115 in 0 : vector<8x32xf32>, vector<8x32xf32> -> vector<16x32xf32>
    %c0_38 = arith.constant 0 : index
    %c0_39 = arith.constant 0 : index
    %122 = vector.load %arg8[%c0_38, %c0_39] : memref<1x32xf32, #tpu.memory_space<vmem>>, vector<1x32xf32>
    %c0_40 = arith.constant 0 : index
    %c0_41 = arith.constant 0 : index
    %123 = vector.load %arg9[%c0_40, %c0_41] : memref<1x32xf32, #tpu.memory_space<vmem>>, vector<1x32xf32>
    %cst_42 = arith.constant dense<0.000000e+00> : vector<16xf32>
    %124 = vector.multi_reduction <add>, %121, %cst_42 [1] : vector<16x32xf32> to vector<16xf32>
    %125 = vector.shape_cast %124 : vector<16xf32> to vector<16x1xf32>
    %cst_43 = arith.constant 3.200000e+01 : f32
    %126 = vector.broadcast %cst_43 : f32 to vector<16x1xf32>
    %127 = arith.divf %125, %126 : vector<16x1xf32>
    %128 = vector.broadcast %127 : vector<16x1xf32> to vector<16x32xf32>
    %129 = arith.subf %121, %128 : vector<16x32xf32>
    %130 = arith.mulf %129, %129 : vector<16x32xf32>
    %cst_44 = arith.constant dense<0.000000e+00> : vector<16xf32>
    %131 = vector.multi_reduction <add>, %130, %cst_44 [1] : vector<16x32xf32> to vector<16xf32>
    %132 = vector.shape_cast %131 : vector<16xf32> to vector<16x1xf32>
    %cst_45 = arith.constant 3.200000e+01 : f32
    %133 = vector.broadcast %cst_45 : f32 to vector<16x1xf32>
    %134 = arith.divf %132, %133 : vector<16x1xf32>
    %135 = vector.broadcast %127 : vector<16x1xf32> to vector<16x32xf32>
    %136 = arith.subf %121, %135 : vector<16x32xf32>
    %cst_46 = arith.constant 9.99999974E-6 : f32
    %137 = vector.broadcast %cst_46 : f32 to vector<16x1xf32>
    %138 = arith.addf %134, %137 : vector<16x1xf32>
    %139 = math.rsqrt %138 : vector<16x1xf32>
    %140 = vector.broadcast %139 : vector<16x1xf32> to vector<16x32xf32>
    %141 = arith.mulf %136, %140 : vector<16x32xf32>
    %142 = vector.broadcast %122 : vector<1x32xf32> to vector<16x32xf32>
    %143 = arith.mulf %141, %142 : vector<16x32xf32>
    %144 = vector.broadcast %123 : vector<1x32xf32> to vector<16x32xf32>
    %145 = arith.addf %143, %144 : vector<16x32xf32>
    %c0_47 = arith.constant 0 : index
    %c0_48 = arith.constant 0 : index
    %146 = vector.load %arg10[%c0_47, %c0_48] : memref<32x64xf32, #tpu.memory_space<vmem>>, vector<32x64xf32>
    %cst_49 = arith.constant dense<0.000000e+00> : vector<16x64xf32>
    %147 = tpu.matmul %145, %146, %cst_49 {dimension_numbers = #tpu.dot_dimension_numbers<[1], [0], [0], [1], [0, 0, 1, 1], [], []>} : vector<16x32xf32>, vector<32x64xf32>, vector<16x64xf32> -> vector<16x64xf32>
    %c0_50 = arith.constant 0 : index
    %c0_51 = arith.constant 0 : index
    %148 = vector.load %arg11[%c0_50, %c0_51] : memref<1x64xf32, #tpu.memory_space<vmem>>, vector<1x64xf32>
    %149 = vector.broadcast %148 : vector<1x64xf32> to vector<16x64xf32>
    %150 = arith.addf %147, %149 : vector<16x64xf32>
    %cst_52 = arith.constant 0.000000e+00 : f32
    %151 = vector.broadcast %cst_52 : f32 to vector<16x64xf32>
    %152 = arith.maximumf %150, %151 : vector<16x64xf32>
    %c0_53 = arith.constant 0 : index
    %c0_54 = arith.constant 0 : index
    %153 = vector.load %arg12[%c0_53, %c0_54] : memref<64x32xf32, #tpu.memory_space<vmem>>, vector<64x32xf32>
    %cst_55 = arith.constant dense<0.000000e+00> : vector<16x32xf32>
    %154 = tpu.matmul %152, %153, %cst_55 {dimension_numbers = #tpu.dot_dimension_numbers<[1], [0], [0], [1], [0, 0, 1, 1], [], []>} : vector<16x64xf32>, vector<64x32xf32>, vector<16x32xf32> -> vector<16x32xf32>
    %c0_56 = arith.constant 0 : index
    %c0_57 = arith.constant 0 : index
    %155 = vector.load %arg13[%c0_56, %c0_57] : memref<1x32xf32, #tpu.memory_space<vmem>>, vector<1x32xf32>
    %156 = vector.broadcast %155 : vector<1x32xf32> to vector<16x32xf32>
    %157 = arith.addf %154, %156 : vector<16x32xf32>
    %158 = arith.addf %157, %121 : vector<16x32xf32>
    %c0_58 = arith.constant 0 : index
    %c0_59 = arith.constant 0 : index
    %159 = vector.load %arg16[%c0_58, %c0_59] : memref<8x32xf32, #tpu.memory_space<vmem>>, vector<8x32xf32>
    %160 = vector.extract_strided_slice %158 {offsets = [0, 0], sizes = [8, 32], strides = [1, 1]} : vector<16x32xf32> to vector<8x32xf32>
    %161 = arith.subf %160, %159 : vector<8x32xf32>
    %cst_60 = arith.constant 5.000000e-01 : f32
    %162 = vector.broadcast %cst_60 : f32 to vector<8x32xf32>
    %163 = arith.mulf %161, %162 : vector<8x32xf32>
    %164 = arith.addf %159, %163 : vector<8x32xf32>
    %cst_61 = arith.constant 1.000000e+00 : f32
    %165 = vector.broadcast %cst_61 : f32 to vector<8x32xf32>
    %166 = arith.cmpf oge, %164, %165 : vector<8x32xf32>
    %167 = arith.extui %166 : vector<8x32xi1> to vector<8x32xi32>
    %168 = arith.sitofp %167 : vector<8x32xi32> to vector<8x32xf32>
    %cst_62 = arith.constant 0.000000e+00 : f32
    %169 = vector.broadcast %cst_62 : f32 to vector<8x32xf32>
    %170 = arith.cmpf ogt, %168, %169 : vector<8x32xf32>
    %cst_63 = arith.constant 0.000000e+00 : f32
    %171 = vector.broadcast %cst_63 : f32 to vector<8x32xf32>
    %172 = arith.select %170, %171, %164 : vector<8x32xi1>, vector<8x32xf32>
    %173 = vector.extract_strided_slice %158 {offsets = [8, 0], sizes = [8, 32], strides = [1, 1]} : vector<16x32xf32> to vector<8x32xf32>
    %174 = arith.subf %173, %172 : vector<8x32xf32>
    %cst_64 = arith.constant 5.000000e-01 : f32
    %175 = vector.broadcast %cst_64 : f32 to vector<8x32xf32>
    %176 = arith.mulf %174, %175 : vector<8x32xf32>
    %177 = arith.addf %172, %176 : vector<8x32xf32>
    %cst_65 = arith.constant 1.000000e+00 : f32
    %178 = vector.broadcast %cst_65 : f32 to vector<8x32xf32>
    %179 = arith.cmpf oge, %177, %178 : vector<8x32xf32>
    %180 = arith.extui %179 : vector<8x32xi1> to vector<8x32xi32>
    %181 = arith.sitofp %180 : vector<8x32xi32> to vector<8x32xf32>
    %cst_66 = arith.constant 0.000000e+00 : f32
    %182 = vector.broadcast %cst_66 : f32 to vector<8x32xf32>
    %183 = arith.cmpf ogt, %181, %182 : vector<8x32xf32>
    %cst_67 = arith.constant 0.000000e+00 : f32
    %184 = vector.broadcast %cst_67 : f32 to vector<8x32xf32>
    %185 = arith.select %183, %184, %177 : vector<8x32xi1>, vector<8x32xf32>
    %c0_68 = arith.constant 0 : index
    %c0_69 = arith.constant 0 : index
    %186 = vector.load %arg16[%c0_68, %c0_69] : memref<8x32xf32, #tpu.memory_space<vmem>>, vector<8x32xf32>
    tpu.vector_store %arg16[%c0_68, %c0_69], %185 {strides = array<i32>} : memref<8x32xf32, #tpu.memory_space<vmem>>, vector<8x32xf32>,
    %187 = tpu.concatenate %168, %181 in 0 : vector<8x32xf32>, vector<8x32xf32> -> vector<16x32xf32>
    %c0_70 = arith.constant 0 : index
    %c0_71 = arith.constant 0 : index
    %188 = vector.load %arg14[%c0_70, %c0_71] : memref<16x32xf32, #tpu.memory_space<vmem>>, vector<16x32xf32>
    tpu.vector_store %arg14[%c0_70, %c0_71], %187 {strides = array<i32>} : memref<16x32xf32, #tpu.memory_space<vmem>>, vector<16x32xf32>,
    return
  }
  func.func @transform_0(%arg0: i32) -> (i32, i32) {
    %c0_i32 = arith.constant 0 : i32
    %c0_i32_0 = arith.constant 0 : i32
    return %arg0, %c0_i32 : i32, i32
  }
  func.func @transform_1(%arg0: i32) -> (i32, i32) {
    %c0_i32 = arith.constant 0 : i32
    %c0_i32_0 = arith.constant 0 : i32
    %c0_i32_1 = arith.constant 0 : i32
    return %c0_i32, %c0_i32_0 : i32, i32
  }
  func.func @transform_2(%arg0: i32) -> (i32, i32) {
    %c0_i32 = arith.constant 0 : i32
    %c0_i32_0 = arith.constant 0 : i32
    %c0_i32_1 = arith.constant 0 : i32
    return %c0_i32, %c0_i32_0 : i32, i32
  }
  func.func @transform_3(%arg0: i32) -> (i32, i32) {
    %c0_i32 = arith.constant 0 : i32
    %c0_i32_0 = arith.constant 0 : i32
    %c0_i32_1 = arith.constant 0 : i32
    return %c0_i32, %c0_i32_0 : i32, i32
  }
  func.func @transform_4(%arg0: i32) -> (i32, i32) {
    %c0_i32 = arith.constant 0 : i32
    %c0_i32_0 = arith.constant 0 : i32
    %c0_i32_1 = arith.constant 0 : i32
    return %c0_i32, %c0_i32_0 : i32, i32
  }
  func.func @transform_5(%arg0: i32) -> (i32, i32) {
    %c0_i32 = arith.constant 0 : i32
    %c0_i32_0 = arith.constant 0 : i32
    %c0_i32_1 = arith.constant 0 : i32
    return %c0_i32, %c0_i32_0 : i32, i32
  }
  func.func @transform_6(%arg0: i32) -> (i32, i32) {
    %c0_i32 = arith.constant 0 : i32
    %c0_i32_0 = arith.constant 0 : i32
    %c0_i32_1 = arith.constant 0 : i32
    return %c0_i32, %c0_i32_0 : i32, i32
  }
  func.func @transform_7(%arg0: i32) -> (i32, i32) {
    %c0_i32 = arith.constant 0 : i32
    %c0_i32_0 = arith.constant 0 : i32
    %c0_i32_1 = arith.constant 0 : i32
    return %c0_i32, %c0_i32_0 : i32, i32
  }
  func.func @transform_8(%arg0: i32) -> (i32, i32) {
    %c0_i32 = arith.constant 0 : i32
    %c0_i32_0 = arith.constant 0 : i32
    %c0_i32_1 = arith.constant 0 : i32
    return %c0_i32, %c0_i32_0 : i32, i32
  }
  func.func @transform_9(%arg0: i32) -> (i32, i32) {
    %c0_i32 = arith.constant 0 : i32
    %c0_i32_0 = arith.constant 0 : i32
    %c0_i32_1 = arith.constant 0 : i32
    return %c0_i32, %c0_i32_0 : i32, i32
  }
  func.func @transform_10(%arg0: i32) -> (i32, i32) {
    %c0_i32 = arith.constant 0 : i32
    %c0_i32_0 = arith.constant 0 : i32
    %c0_i32_1 = arith.constant 0 : i32
    return %c0_i32, %c0_i32_0 : i32, i32
  }
  func.func @transform_11(%arg0: i32) -> (i32, i32) {
    %c0_i32 = arith.constant 0 : i32
    %c0_i32_0 = arith.constant 0 : i32
    %c0_i32_1 = arith.constant 0 : i32
    return %c0_i32, %c0_i32_0 : i32, i32
  }
  func.func @transform_12(%arg0: i32) -> (i32, i32) {
    %c0_i32 = arith.constant 0 : i32
    %c0_i32_0 = arith.constant 0 : i32
    %c0_i32_1 = arith.constant 0 : i32
    return %c0_i32, %c0_i32_0 : i32, i32
  }
  func.func @transform_13(%arg0: i32) -> (i32, i32) {
    %c0_i32 = arith.constant 0 : i32
    %c0_i32_0 = arith.constant 0 : i32
    return %arg0, %c0_i32 : i32, i32
  }
}

</mosaic_0001>

<llo_original>
// kernel: tpu_custom_call.1
$region0: #{tpu_custom_call.1}
  #allocation0 [shape = 'u32[]', space=smem, size = 0x4, offset = 0x4, fixed_abs, tag = 'smem constant byte address 0x4 - core index']
  #allocation1 [shape = 'u32[144,128]{1,0:T(1,128)}', space=vmem, size = 0x12000, scoped, tag = 'internal scratch']
  #allocation2 [shape = 'f32[8,32]{1,0:T(8,128)}', space=vmem, size = 0x1000, scoped, tag = 'scratch operand']
  #allocation3 [shape = 'f32[8,32]{1,0:T(8,128)}', space=vmem, size = 0x1000, scoped, tag = 'scratch operand']
  %s0 = inlined_call_operand.hbm [shape: f32[16,32], index: 0, kind: input, shape index: {}]
  %s1 = inlined_call_operand.vmem [shape: f32[1,32], index: 1, kind: input, shape index: {}]
  %s2 = inlined_call_operand.vmem [shape: f32[1,32], index: 2, kind: input, shape index: {}]
  %s3 = inlined_call_operand.vmem [shape: f32[32,96], index: 3, kind: input, shape index: {}]
  %s4 = inlined_call_operand.vmem [shape: f32[1,96], index: 4, kind: input, shape index: {}]
  %s5 = inlined_call_operand.vmem [shape: f32[32,32], index: 5, kind: input, shape index: {}]
  %s6 = inlined_call_operand.vmem [shape: f32[1,32], index: 6, kind: input, shape index: {}]
  %s7 = inlined_call_operand.vmem [shape: f32[1,32], index: 7, kind: input, shape index: {}]
  %s8 = inlined_call_operand.vmem [shape: f32[1,32], index: 8, kind: input, shape index: {}]
  %s9 = inlined_call_operand.vmem [shape: f32[32,64], index: 9, kind: input, shape index: {}]
  %s10 = inlined_call_operand.vmem [shape: f32[1,64], index: 10, kind: input, shape index: {}]
  %s11 = inlined_call_operand.vmem [shape: f32[64,32], index: 11, kind: input, shape index: {}]
  %s12 = inlined_call_operand.vmem [shape: f32[1,32], index: 12, kind: input, shape index: {}]
  %s13 = inlined_call_operand.hbm [shape: f32[16,32], index: 13, kind: output, shape index: {}]
  %s14 = sld [smem:[#allocation0]]
  $region70: #{tpu_custom_call.1} parent=0
    _
  %s16 = ssub.s32 1, %s14
  %s17 = scalar_select 0, %s16, %s14
  $region1: #{tpu_custom_call.1} parent=0
    #allocation4 [shape = 'u8[8192]{0}', space=vmem, size = 0x2000, scoped, tag = 'input window, operand 0, single buffered']
    #allocation5 [shape = 's32[1]{0}', space=sflag, size = 0x4, scoped, tag = 'scoped memory for tpu_custom_call.1']
    #allocation6 [shape = 's32[1]{0}', space=sflag, size = 0x4, scoped, tag = 'scoped memory for tpu_custom_call.1']
    #allocation7 [shape = 'u8[8192]{0}', space=vmem, size = 0x2000, scoped, tag = 'output window, operand 0, single buffered']
    %18 = vsyncpa [#allocation5], 0
    %19 = vsyncpa [#allocation6], 0
    // Predicated region
    $region2: #{tpu_custom_call.1} parent=1 // pred_check
      _
    $region3: #{tpu_custom_call.1} parent=1 // pred_check_branch
      %21 = sbr.rel (0) target = $region5
    $region4: #{tpu_custom_call.1} parent=1 // pred_region
      %s23 = ssub.s32 256, 256
      %24 = vsyncadd [#allocation5], %s23
      %s25 = sshll.u32 [#allocation4], 4
      %s26 = int_to_ptr.vmem [resolvable:$true] %s25
      %31 = dma.hbm_to_vmem [thread:$0]  %s0, 256, %s26, [#allocation5], 128, 128, 8
    $region5: #{tpu_custom_call.1} parent=1 // pred_fallthru
      _
    // Predicated region
    $region6: #{tpu_custom_call.1} parent=1 // pred_check
      _
    $region7: #{tpu_custom_call.1} parent=1 // pred_check_branch
      %33 = sbr.rel (0) target = $region9
    $region8: #{tpu_custom_call.1} parent=1 // pred_region
      _
    $region9: #{tpu_custom_call.1} parent=1 // pred_fallthru
      _
    // Predicated region
    $region10: #{tpu_custom_call.1} parent=1 // pred_check
      _
    $region11: #{tpu_custom_call.1} parent=1 // pred_check_branch
      %35 = sbr.rel (0) target = $region13
    $region12: #{tpu_custom_call.1} parent=1 // pred_region
      _
    $region13: #{tpu_custom_call.1} parent=1 // pred_fallthru
      _
    // Predicated region
    $region14: #{tpu_custom_call.1} parent=1 // pred_check
      _
    $region15: #{tpu_custom_call.1} parent=1 // pred_check_branch
      %37 = sbr.rel (0) target = $region17
    $region16: #{tpu_custom_call.1} parent=1 // pred_region
      _
    $region17: #{tpu_custom_call.1} parent=1 // pred_fallthru
      _
    // Predicated region
    $region18: #{tpu_custom_call.1} parent=1 // pred_check
      _
    $region19: #{tpu_custom_call.1} parent=1 // pred_check_branch
      %39 = sbr.rel (0) target = $region21
    $region20: #{tpu_custom_call.1} parent=1 // pred_region
      _
    $region21: #{tpu_custom_call.1} parent=1 // pred_fallthru
      _
    // Predicated region
    $region22: #{tpu_custom_call.1} parent=1 // pred_check
      _
    $region23: #{tpu_custom_call.1} parent=1 // pred_check_branch
      %41 = sbr.rel (0) target = $region25
    $region24: #{tpu_custom_call.1} parent=1 // pred_region
      _
    $region25: #{tpu_custom_call.1} parent=1 // pred_fallthru
      _
    // Predicated region
    $region26: #{tpu_custom_call.1} parent=1 // pred_check
      _
    $region27: #{tpu_custom_call.1} parent=1 // pred_check_branch
      %43 = sbr.rel (0) target = $region29
    $region28: #{tpu_custom_call.1} parent=1 // pred_region
      _
    $region29: #{tpu_custom_call.1} parent=1 // pred_fallthru
      _
    // Predicated region
    $region30: #{tpu_custom_call.1} parent=1 // pred_check
      _
    $region31: #{tpu_custom_call.1} parent=1 // pred_check_branch
      %45 = sbr.rel (0) target = $region33
    $region32: #{tpu_custom_call.1} parent=1 // pred_region
      _
    $region33: #{tpu_custom_call.1} parent=1 // pred_fallthru
      _
    // Predicated region
    $region34: #{tpu_custom_call.1} parent=1 // pred_check
      _
    $region35: #{tpu_custom_call.1} parent=1 // pred_check_branch
      %47 = sbr.rel (0) target = $region37
    $region36: #{tpu_custom_call.1} parent=1 // pred_region
      _
    $region37: #{tpu_custom_call.1} parent=1 // pred_fallthru
      _
    // Predicated region
    $region38: #{tpu_custom_call.1} parent=1 // pred_check
      _
    $region39: #{tpu_custom_call.1} parent=1 // pred_check_branch
      %49 = sbr.rel (0) target = $region41
    $region40: #{tpu_custom_call.1} parent=1 // pred_region
      _
    $region41: #{tpu_custom_call.1} parent=1 // pred_fallthru
      _
    // Predicated region
    $region42: #{tpu_custom_call.1} parent=1 // pred_check
      _
    $region43: #{tpu_custom_call.1} parent=1 // pred_check_branch
      %51 = sbr.rel (0) target = $region45
    $region44: #{tpu_custom_call.1} parent=1 // pred_region
      _
    $region45: #{tpu_custom_call.1} parent=1 // pred_fallthru
      _
    // Predicated region
    $region46: #{tpu_custom_call.1} parent=1 // pred_check
      _
    $region47: #{tpu_custom_call.1} parent=1 // pred_check_branch
      %53 = sbr.rel (0) target = $region49
    $region48: #{tpu_custom_call.1} parent=1 // pred_region
      _
    $region49: #{tpu_custom_call.1} parent=1 // pred_fallthru
      _
    // Predicated region
    $region50: #{tpu_custom_call.1} parent=1 // pred_check
      _
    $region51: #{tpu_custom_call.1} parent=1 // pred_check_branch
      %55 = sbr.rel (0) target = $region53
    $region52: #{tpu_custom_call.1} parent=1 // pred_region
      _
    $region53: #{tpu_custom_call.1} parent=1 // pred_fallthru
      _
    // Predicated region
    $region54: #{tpu_custom_call.1} parent=1 // pred_check
      _
    $region55: #{tpu_custom_call.1} parent=1 // pred_check_branch
      %57 = sbr.rel (0) target = $region57
    $region56: #{tpu_custom_call.1} parent=1 // pred_region
      %58 = dma.done [#allocation5], 256
    $region57: #{tpu_custom_call.1} parent=1 // pred_fallthru
      _
    %p59 = scmp.eq.s32.totalorder 0, 0
    // Predicated region
    $region58: #{tpu_custom_call.1} parent=1 // pred_check
      %p60 = pneg %p59
    $region59: #{tpu_custom_call.1} parent=1 // pred_check_branch
      %62 = sbr.rel (%p60) target = $region61
    $region60: #{tpu_custom_call.1} parent=1 // pred_region
      %vm63 = vcmask 261120
      %64 = vst.msk [vmem:[#allocation2] sm:$0xff] %vm63, 0.0
      %65 = vst.msk [vmem:[#allocation3] sm:$0xff] %vm63, 0.0
    $region61: #{tpu_custom_call.1} parent=1 // pred_fallthru
      _
    %v66 = vld [vmem:[#allocation4] sm:$0xff]
    %v67 = vld [vmem:[#allocation4 + $0x8] sm:$0xff]
    %v68 = vld [vmem:[%s1] sm:$0x1]
    %v69 = vld [vmem:[%s2] sm:$0x1]
    %vm70 = vcmask 261120
    %v71 = vsel %vm70, %v66, 0.0
    %72 = vadd.xlane.f32.xlu0 %v71
    %v73 = vpop.xlane.xlu0 %72
    %v74 = vsel %vm70, %v67, 0.0
    %75 = vadd.xlane.f32.xlu0 %v74
    %v76 = vpop.xlane.xlu0 %75
    %v77 = vrcp.pop 32.0
    %v78 = vmul.f32 %v73, %v77
    %v79 = vmul.f32 %v76, %v77
    %v80 = vsub.f32 %v66, %v78
    %v81 = vsub.f32 %v67, %v79
    %v82 = vmul.f32 %v80, %v80
    %v83 = vmul.f32 %v81, %v81
    %v84 = vsel %vm70, %v82, 0.0
    %85 = vadd.xlane.f32.xlu0 %v84
    %v86 = vpop.xlane.xlu0 %85
    %v87 = vsel %vm70, %v83, 0.0
    %88 = vadd.xlane.f32.xlu0 %v87
    %v89 = vpop.xlane.xlu0 %88
    %v90 = vmul.f32 %v86, %v77
    %v91 = vmul.f32 %v89, %v77
    %v92 = vadd.f32 %v90, 1e-05
    %v93 = vadd.f32 %v91, 1e-05
    %v94 = vrsqrt.pop %v92
    %v95 = vrsqrt.pop %v93
    %v96 = vmul.f32 %v80, %v94
    %v97 = vmul.f32 %v81, %v95
    %v99 = vlaneseq
    %v100 = vshrl.u32 %v99, 7
    %v101 = vsub.s32 0, %v100
    %v102 = vrot.slane %v68, %v101
    %v104 = vmul.f32 %v96, %v102
    %v105 = vmul.f32 %v97, %v102
    %v107 = vlaneseq
    %v108 = vshrl.u32 %v107, 7
    %v109 = vsub.s32 0, %v108
    %v110 = vrot.slane %v69, %v109
    %v112 = vadd.f32 %v104, %v110
    %v113 = vadd.f32 %v105, %v110
    %v114 = vld [vmem:[%s3] sm:$0xff]
    %v115 = vld [vmem:[%s3 + $0x8] sm:$0xff]
    %v116 = vld [vmem:[%s3 + $0x10] sm:$0xff]
    %v117 = vld [vmem:[%s3 + $0x18] sm:$0xff]
    %v118 = vld [vmem:[%s4] sm:$0x1]
    %v120 = vlaneseq
    %v121 = vshrl.u32 %v120, 7
    %v122 = vsub.s32 0, %v121
    %v123 = vrot.slane %v118, %v122
    %v126 = vsel %vm70, %v112, 0
    %v129 = vsel %vm70, %v113, 0
    %131 = vmatprep.subr.mxu0 0.0
    %132 = vmatpush1.msra.mxu0 0.0
    %133 = vmatprep.subr.mxu0 0.0
    %134 = vmatpush1.msra.mxu0 0.0
    %135 = vmatprep.subr.mxu0 0.0
    %136 = vmatpush1.msra.mxu0 0.0
    %137 = vmatprep.subr.mxu0 0.0
    %138 = vmatpush1.msra.mxu0 0.0
    %139 = vmatprep.subr.mxu0 0.0
    %140 = vmatpush1.msra.mxu0 0.0
    %141 = vmatprep.subr.mxu0 0.0
    %142 = vmatpush1.msra.mxu0 0.0
    %143 = vmatprep.subr.mxu0 0.0
    %144 = vmatpush1.msra.mxu0 0.0
    %145 = vmatprep.subr.mxu0 0.0
    %146 = vmatpush1.msra.mxu0 0.0
    %147 = vmatprep.subr.mxu0 0.0
    %148 = vmatpush1.msra.mxu0 0.0
    %149 = vmatprep.subr.mxu0 0.0
    %150 = vmatpush1.msra.mxu0 0.0
    %151 = vmatprep.subr.mxu0 0.0
    %152 = vmatpush1.msra.mxu0 0.0
    %153 = vmatprep.subr.mxu0 0.0
    %154 = vmatpush1.msra.mxu0 0.0
    %155 = vmatprep.subr.mxu0 0.0
    %156 = vmatpush1.msra.mxu0 %v117
    %157 = vmatprep.subr.mxu0 0.0
    %158 = vmatpush1.msra.mxu0 %v116
    %159 = vmatprep.subr.mxu0 0.0
    %160 = vmatpush1.msra.mxu0 %v115
    %161 = vmatprep.subr.mxu0 0.0
    %162 = vmatpush1.msra.mxu0 %v114
    %163 = vmatprep.subr.mxu0 0.0
    %164 = vmatpush2.msra.mxu0 0.0
    %165 = vmatprep.subr.mxu0 0.0
    %166 = vmatpush2.msra.mxu0 0.0
    %167 = vmatprep.subr.mxu0 0.0
    %168 = vmatpush2.msra.mxu0 0.0
    %169 = vmatprep.subr.mxu0 0.0
    %170 = vmatpush2.msra.mxu0 0.0
    %171 = vmatprep.subr.mxu0 0.0
    %172 = vmatpush2.msra.mxu0 0.0
    %173 = vmatprep.subr.mxu0 0.0
    %174 = vmatpush2.msra.mxu0 0.0
    %175 = vmatprep.subr.mxu0 0.0
    %176 = vmatpush2.msra.mxu0 0.0
    %177 = vmatprep.subr.mxu0 0.0
    %178 = vmatpush2.msra.mxu0 0.0
    %179 = vmatprep.subr.mxu0 0.0
    %180 = vmatpush2.msra.mxu0 0.0
    %181 = vmatprep.subr.mxu0 0.0
    %182 = vmatpush2.msra.mxu0 0.0
    %183 = vmatprep.subr.mxu0 0.0
    %184 = vmatpush2.msra.mxu0 0.0
    %185 = vmatprep.subr.mxu0 0.0
    %186 = vmatpush2.msra.mxu0 0.0
    %187 = vmatprep.subr.mxu0 0.0
    %188 = vmatpush2.msra.mxu0 0.0
    %189 = vmatprep.subr.mxu0 0.0
    %190 = vmatpush2.msra.mxu0 0.0
    %191 = vmatprep.subr.mxu0 0.0
    %192 = vmatpush2.msra.mxu0 0.0
    %193 = vmatprep.subr.mxu0 0.0
    %194 = vmatpush2.msra.mxu0 0.0
    %195 = vmatprep.mubr.f32.mxu0 0.0
    %196 = vmatmul.mubr.f32.gmra.mxu0 %v126
    %v197 = vpop.f32.mrf.mxu0
    %v198 = vadd.f32 %v123, %v197
    %v199 = vpop.f32.mrf.mxu0
    %200 = vmatprep.mubr.f32.mxu0 0.0
    %201 = vmatmul.mubr.f32.gmra.mxu0 %v129
    %v202 = vpop.f32.mrf.mxu0
    %v203 = vadd.f32 %v123, %v202
    %v204 = vpop.f32.mrf.mxu0
    %205 = vdwg.mxu0
    %208 = vrot.lane.b32.xlu0 %v198, 120
    %v209 = vpop.permute.xlu0 %208
    %210 = vrot.lane.b32.xlu0 %v203, 120
    %v211 = vpop.permute.xlu0 %210
    %212 = vrot.lane.b32.xlu0 %v198, 112
    %v213 = vpop.permute.xlu0 %212
    %214 = vrot.lane.b32.xlu0 %v203, 112
    %v215 = vpop.permute.xlu0 %214
    %216 = vrot.lane.b32.xlu0 %v198, 104
    %v217 = vpop.permute.xlu0 %216
    %218 = vrot.lane.b32.xlu0 %v203, 104
    %v219 = vpop.permute.xlu0 %218
    %220 = vrot.lane.b32.xlu0 %v198, 96
    %v221 = vpop.permute.xlu0 %220
    %vm222 = vcmask 64512
    %v223 = vsel %vm222, %v198, 0
    %v225 = vsel %vm222, %v221, 0
    %227 = vmatprep.subr.mxu0 0.0
    %228 = vmatpush1.xpose.msra.mxu0 0.0
    %229 = vmatprep.subr.mxu0 0.0
    %230 = vmatpush1.xpose.msra.mxu0 0.0
    %231 = vmatprep.subr.mxu0 0.0
    %232 = vmatpush1.xpose.msra.mxu0 0.0
    %233 = vmatprep.subr.mxu0 0.0
    %234 = vmatpush1.xpose.msra.mxu0 0.0
    %235 = vmatprep.subr.mxu0 0.0
    %236 = vmatpush1.xpose.msra.mxu0 0.0
    %237 = vmatprep.subr.mxu0 0.0
    %238 = vmatpush1.xpose.msra.mxu0 0.0
    %239 = vmatprep.subr.mxu0 0.0
    %240 = vmatpush1.xpose.msra.mxu0 0.0
    %241 = vmatprep.subr.mxu0 0.0
    %242 = vmatpush1.xpose.msra.mxu0 0.0
    %243 = vmatprep.subr.mxu0 0.0
    %244 = vmatpush1.xpose.msra.mxu0 0.0
    %245 = vmatprep.subr.mxu0 0.0
    %246 = vmatpush1.xpose.msra.mxu0 0.0
    %247 = vmatprep.subr.mxu0 0.0
    %248 = vmatpush1.xpose.msra.mxu0 0.0
    %249 = vmatprep.subr.mxu0 0.0
    %250 = vmatpush1.xpose.msra.mxu0 0.0
    %251 = vmatprep.subr.mxu0 0.0
    %252 = vmatpush1.xpose.msra.mxu0 0.0
    %253 = vmatprep.subr.mxu0 0.0
    %254 = vmatpush1.xpose.msra.mxu0 0.0
    %255 = vmatprep.subr.mxu0 0.0
    %256 = vmatpush1.xpose.msra.mxu0 0.0
    %257 = vmatprep.subr.mxu0 0.0
    %258 = vmatpush1.xpose.msra.mxu0 %v225
    %259 = vmatprep.subr.mxu0 0.0
    %260 = vmatpush2.xpose.msra.mxu0 0.0
    %261 = vmatprep.subr.mxu0 0.0
    %262 = vmatpush2.xpose.msra.mxu0 0.0
    %263 = vmatprep.subr.mxu0 0.0
    %264 = vmatpush2.xpose.msra.mxu0 0.0
    %265 = vmatprep.subr.mxu0 0.0
    %266 = vmatpush2.xpose.msra.mxu0 0.0
    %267 = vmatprep.subr.mxu0 0.0
    %268 = vmatpush2.xpose.msra.mxu0 0.0
    %269 = vmatprep.subr.mxu0 0.0
    %270 = vmatpush2.xpose.msra.mxu0 0.0
    %271 = vmatprep.subr.mxu0 0.0
    %272 = vmatpush2.xpose.msra.mxu0 0.0
    %273 = vmatprep.subr.mxu0 0.0
    %274 = vmatpush2.xpose.msra.mxu0 0.0
    %275 = vmatprep.subr.mxu0 0.0
    %276 = vmatpush2.xpose.msra.mxu0 0.0
    %277 = vmatprep.subr.mxu0 0.0
    %278 = vmatpush2.xpose.msra.mxu0 0.0
    %279 = vmatprep.subr.mxu0 0.0
    %280 = vmatpush2.xpose.msra.mxu0 0.0
    %281 = vmatprep.subr.mxu0 0.0
    %282 = vmatpush2.xpose.msra.mxu0 0.0
    %283 = vmatprep.subr.mxu0 0.0
    %284 = vmatpush2.xpose.msra.mxu0 0.0
    %285 = vmatprep.subr.mxu0 0.0
    %286 = vmatpush2.xpose.msra.mxu0 0.0
    %287 = vmatprep.subr.mxu0 0.0
    %288 = vmatpush2.xpose.msra.mxu0 0.0
    %289 = vmatprep.subr.mxu0 0.0
    %290 = vmatpush2.xpose.msra.mxu0 0.0
    %291 = vmatprep.mubr.f32.mxu0 0.0
    %292 = vmatmul.mubr.f32.gmra.mxu0 %v223
    %v293 = vpop.f32.mrf.mxu0
    %v294 = vadd.f32 0.0, %v293
    %v295 = vpop.f32.mrf.mxu0
    %296 = vdwg.mxu0
    %297 = vrot.lane.b32.xlu0 %v203, 96
    %v298 = vpop.permute.xlu0 %297
    %v299 = vsel %vm222, %v203, 0
    %v301 = vsel %vm222, %v298, 0
    %303 = vmatprep.subr.mxu0 0.0
    %304 = vmatpush1.xpose.msra.mxu0 0.0
    %305 = vmatprep.subr.mxu0 0.0
    %306 = vmatpush1.xpose.msra.mxu0 0.0
    %307 = vmatprep.subr.mxu0 0.0
    %308 = vmatpush1.xpose.msra.mxu0 0.0
    %309 = vmatprep.subr.mxu0 0.0
    %310 = vmatpush1.xpose.msra.mxu0 0.0
    %311 = vmatprep.subr.mxu0 0.0
    %312 = vmatpush1.xpose.msra.mxu0 0.0
    %313 = vmatprep.subr.mxu0 0.0
    %314 = vmatpush1.xpose.msra.mxu0 0.0
    %315 = vmatprep.subr.mxu0 0.0
    %316 = vmatpush1.xpose.msra.mxu0 0.0
    %317 = vmatprep.subr.mxu0 0.0
    %318 = vmatpush1.xpose.msra.mxu0 0.0
    %319 = vmatprep.subr.mxu0 0.0
    %320 = vmatpush1.xpose.msra.mxu0 0.0
    %321 = vmatprep.subr.mxu0 0.0
    %322 = vmatpush1.xpose.msra.mxu0 0.0
    %323 = vmatprep.subr.mxu0 0.0
    %324 = vmatpush1.xpose.msra.mxu0 0.0
    %325 = vmatprep.subr.mxu0 0.0
    %326 = vmatpush1.xpose.msra.mxu0 0.0
    %327 = vmatprep.subr.mxu0 0.0
    %328 = vmatpush1.xpose.msra.mxu0 0.0
    %329 = vmatprep.subr.mxu0 0.0
    %330 = vmatpush1.xpose.msra.mxu0 0.0
    %331 = vmatprep.subr.mxu0 0.0
    %332 = vmatpush1.xpose.msra.mxu0 0.0
    %333 = vmatprep.subr.mxu0 0.0
    %334 = vmatpush1.xpose.msra.mxu0 %v301
    %335 = vmatprep.subr.mxu0 0.0
    %336 = vmatpush2.xpose.msra.mxu0 0.0
    %337 = vmatprep.subr.mxu0 0.0
    %338 = vmatpush2.xpose.msra.mxu0 0.0
    %339 = vmatprep.subr.mxu0 0.0
    %340 = vmatpush2.xpose.msra.mxu0 0.0
    %341 = vmatprep.subr.mxu0 0.0
    %342 = vmatpush2.xpose.msra.mxu0 0.0
    %343 = vmatprep.subr.mxu0 0.0
    %344 = vmatpush2.xpose.msra.mxu0 0.0
    %345 = vmatprep.subr.mxu0 0.0
    %346 = vmatpush2.xpose.msra.mxu0 0.0
    %347 = vmatprep.subr.mxu0 0.0
    %348 = vmatpush2.xpose.msra.mxu0 0.0
    %349 = vmatprep.subr.mxu0 0.0
    %350 = vmatpush2.xpose.msra.mxu0 0.0
    %351 = vmatprep.subr.mxu0 0.0
    %352 = vmatpush2.xpose.msra.mxu0 0.0
    %353 = vmatprep.subr.mxu0 0.0
    %354 = vmatpush2.xpose.msra.mxu0 0.0
    %355 = vmatprep.subr.mxu0 0.0
    %356 = vmatpush2.xpose.msra.mxu0 0.0
    %357 = vmatprep.subr.mxu0 0.0
    %358 = vmatpush2.xpose.msra.mxu0 0.0
    %359 = vmatprep.subr.mxu0 0.0
    %360 = vmatpush2.xpose.msra.mxu0 0.0
    %361 = vmatprep.subr.mxu0 0.0
    %362 = vmatpush2.xpose.msra.mxu0 0.0
    %363 = vmatprep.subr.mxu0 0.0
    %364 = vmatpush2.xpose.msra.mxu0 0.0
    %365 = vmatprep.subr.mxu0 0.0
    %366 = vmatpush2.xpose.msra.mxu0 0.0
    %367 = vmatprep.mubr.f32.mxu0 0.0
    %368 = vmatmul.mubr.f32.gmra.mxu0 %v299
    %v369 = vpop.f32.mrf.mxu0
    %v370 = vadd.f32 0.0, %v369
    %v371 = vpop.f32.mrf.mxu0
    %372 = vdwg.mxu0
    %373 = vrot.lane.b32.xlu0 %v209, 96
    %v374 = vpop.permute.xlu0 %373
    %v375 = vsel %vm222, %v209, 0
    %v377 = vsel %vm222, %v374, 0
    %379 = vmatprep.subr.mxu0 0.0
    %380 = vmatpush1.xpose.msra.mxu0 0.0
    %381 = vmatprep.subr.mxu0 0.0
    %382 = vmatpush1.xpose.msra.mxu0 0.0
    %383 = vmatprep.subr.mxu0 0.0
    %384 = vmatpush1.xpose.msra.mxu0 0.0
    %385 = vmatprep.subr.mxu0 0.0
    %386 = vmatpush1.xpose.msra.mxu0 0.0
    %387 = vmatprep.subr.mxu0 0.0
    %388 = vmatpush1.xpose.msra.mxu0 0.0
    %389 = vmatprep.subr.mxu0 0.0
    %390 = vmatpush1.xpose.msra.mxu0 0.0
    %391 = vmatprep.subr.mxu0 0.0
    %392 = vmatpush1.xpose.msra.mxu0 0.0
    %393 = vmatprep.subr.mxu0 0.0
    %394 = vmatpush1.xpose.msra.mxu0 0.0
    %395 = vmatprep.subr.mxu0 0.0
    %396 = vmatpush1.xpose.msra.mxu0 0.0
    %397 = vmatprep.subr.mxu0 0.0
    %398 = vmatpush1.xpose.msra.mxu0 0.0
    %399 = vmatprep.subr.mxu0 0.0
    %400 = vmatpush1.xpose.msra.mxu0 0.0
    %401 = vmatprep.subr.mxu0 0.0
    %402 = vmatpush1.xpose.msra.mxu0 0.0
    %403 = vmatprep.subr.mxu0 0.0
    %404 = vmatpush1.xpose.msra.mxu0 0.0
    %405 = vmatprep.subr.mxu0 0.0
    %406 = vmatpush1.xpose.msra.mxu0 0.0
    %407 = vmatprep.subr.mxu0 0.0
    %408 = vmatpush1.xpose.msra.mxu0 0.0
    %409 = vmatprep.subr.mxu0 0.0
    %410 = vmatpush1.xpose.msra.mxu0 %v377
    %411 = vmatprep.subr.mxu0 0.0
    %412 = vmatpush2.xpose.msra.mxu0 0.0
    %413 = vmatprep.subr.mxu0 0.0
    %414 = vmatpush2.xpose.msra.mxu0 0.0
    %415 = vmatprep.subr.mxu0 0.0
    %416 = vmatpush2.xpose.msra.mxu0 0.0
    %417 = vmatprep.subr.mxu0 0.0
    %418 = vmatpush2.xpose.msra.mxu0 0.0
    %419 = vmatprep.subr.mxu0 0.0
    %420 = vmatpush2.xpose.msra.mxu0 0.0
    %421 = vmatprep.subr.mxu0 0.0
    %422 = vmatpush2.xpose.msra.mxu0 0.0
    %423 = vmatprep.subr.mxu0 0.0
    %424 = vmatpush2.xpose.msra.mxu0 0.0
    %425 = vmatprep.subr.mxu0 0.0
    %426 = vmatpush2.xpose.msra.mxu0 0.0
    %427 = vmatprep.subr.mxu0 0.0
    %428 = vmatpush2.xpose.msra.mxu0 0.0
    %429 = vmatprep.subr.mxu0 0.0
    %430 = vmatpush2.xpose.msra.mxu0 0.0
    %431 = vmatprep.subr.mxu0 0.0
    %432 = vmatpush2.xpose.msra.mxu0 0.0
    %433 = vmatprep.subr.mxu0 0.0
    %434 = vmatpush2.xpose.msra.mxu0 0.0
    %435 = vmatprep.subr.mxu0 0.0
    %436 = vmatpush2.xpose.msra.mxu0 0.0
    %437 = vmatprep.subr.mxu0 0.0
    %438 = vmatpush2.xpose.msra.mxu0 0.0
    %439 = vmatprep.subr.mxu0 0.0
    %440 = vmatpush2.xpose.msra.mxu0 0.0
    %441 = vmatprep.subr.mxu0 0.0
    %442 = vmatpush2.xpose.msra.mxu0 0.0
    %443 = vmatprep.mubr.f32.mxu0 0.0
    %444 = vmatmul.mubr.f32.gmra.mxu0 %v375
    %v445 = vpop.f32.mrf.mxu0
    %v446 = vadd.f32 0.0, %v445
    %v447 = vpop.f32.mrf.mxu0
    %448 = vdwg.mxu0
    %449 = vrot.lane.b32.xlu0 %v211, 96
    %v450 = vpop.permute.xlu0 %449
    %v451 = vsel %vm222, %v211, 0
    %v453 = vsel %vm222, %v450, 0
    %455 = vmatprep.subr.mxu0 0.0
    %456 = vmatpush1.xpose.msra.mxu0 0.0
    %457 = vmatprep.subr.mxu0 0.0
    %458 = vmatpush1.xpose.msra.mxu0 0.0
    %459 = vmatprep.subr.mxu0 0.0
    %460 = vmatpush1.xpose.msra.mxu0 0.0
    %461 = vmatprep.subr.mxu0 0.0
    %462 = vmatpush1.xpose.msra.mxu0 0.0
    %463 = vmatprep.subr.mxu0 0.0
    %464 = vmatpush1.xpose.msra.mxu0 0.0
    %465 = vmatprep.subr.mxu0 0.0
    %466 = vmatpush1.xpose.msra.mxu0 0.0
    %467 = vmatprep.subr.mxu0 0.0
    %468 = vmatpush1.xpose.msra.mxu0 0.0
    %469 = vmatprep.subr.mxu0 0.0
    %470 = vmatpush1.xpose.msra.mxu0 0.0
    %471 = vmatprep.subr.mxu0 0.0
    %472 = vmatpush1.xpose.msra.mxu0 0.0
    %473 = vmatprep.subr.mxu0 0.0
    %474 = vmatpush1.xpose.msra.mxu0 0.0
    %475 = vmatprep.subr.mxu0 0.0
    %476 = vmatpush1.xpose.msra.mxu0 0.0
    %477 = vmatprep.subr.mxu0 0.0
    %478 = vmatpush1.xpose.msra.mxu0 0.0
    %479 = vmatprep.subr.mxu0 0.0
    %480 = vmatpush1.xpose.msra.mxu0 0.0
    %481 = vmatprep.subr.mxu0 0.0
    %482 = vmatpush1.xpose.msra.mxu0 0.0
    %483 = vmatprep.subr.mxu0 0.0
    %484 = vmatpush1.xpose.msra.mxu0 0.0
    %485 = vmatprep.subr.mxu0 0.0
    %486 = vmatpush1.xpose.msra.mxu0 %v453
    %487 = vmatprep.subr.mxu0 0.0
    %488 = vmatpush2.xpose.msra.mxu0 0.0
    %489 = vmatprep.subr.mxu0 0.0
    %490 = vmatpush2.xpose.msra.mxu0 0.0
    %491 = vmatprep.subr.mxu0 0.0
    %492 = vmatpush2.xpose.msra.mxu0 0.0
    %493 = vmatprep.subr.mxu0 0.0
    %494 = vmatpush2.xpose.msra.mxu0 0.0
    %495 = vmatprep.subr.mxu0 0.0
    %496 = vmatpush2.xpose.msra.mxu0 0.0
    %497 = vmatprep.subr.mxu0 0.0
    %498 = vmatpush2.xpose.msra.mxu0 0.0
    %499 = vmatprep.subr.mxu0 0.0
    %500 = vmatpush2.xpose.msra.mxu0 0.0
    %501 = vmatprep.subr.mxu0 0.0
    %502 = vmatpush2.xpose.msra.mxu0 0.0
    %503 = vmatprep.subr.mxu0 0.0
    %504 = vmatpush2.xpose.msra.mxu0 0.0
    %505 = vmatprep.subr.mxu0 0.0
    %506 = vmatpush2.xpose.msra.mxu0 0.0
    %507 = vmatprep.subr.mxu0 0.0
    %508 = vmatpush2.xpose.msra.mxu0 0.0
    %509 = vmatprep.subr.mxu0 0.0
    %510 = vmatpush2.xpose.msra.mxu0 0.0
    %511 = vmatprep.subr.mxu0 0.0
    %512 = vmatpush2.xpose.msra.mxu0 0.0
    %513 = vmatprep.subr.mxu0 0.0
    %514 = vmatpush2.xpose.msra.mxu0 0.0
    %515 = vmatprep.subr.mxu0 0.0
    %516 = vmatpush2.xpose.msra.mxu0 0.0
    %517 = vmatprep.subr.mxu0 0.0
    %518 = vmatpush2.xpose.msra.mxu0 0.0
    %519 = vmatprep.mubr.f32.mxu0 0.0
    %520 = vmatmul.mubr.f32.gmra.mxu0 %v451
    %v521 = vpop.f32.mrf.mxu0
    %v522 = vadd.f32 0.0, %v521
    %v523 = vpop.f32.mrf.mxu0
    %524 = vdwg.mxu0
    %525 = vrot.lane.b32.xlu0 %v213, 96
    %v526 = vpop.permute.xlu0 %525
    %v527 = vsel %vm222, %v213, 0
    %v529 = vsel %vm222, %v526, 0
    %531 = vmatprep.subr.mxu0 0.0
    %532 = vmatpush1.xpose.msra.mxu0 0.0
    %533 = vmatprep.subr.mxu0 0.0
    %534 = vmatpush1.xpose.msra.mxu0 0.0
    %535 = vmatprep.subr.mxu0 0.0
    %536 = vmatpush1.xpose.msra.mxu0 0.0
    %537 = vmatprep.subr.mxu0 0.0
    %538 = vmatpush1.xpose.msra.mxu0 0.0
    %539 = vmatprep.subr.mxu0 0.0
    %540 = vmatpush1.xpose.msra.mxu0 0.0
    %541 = vmatprep.subr.mxu0 0.0
    %542 = vmatpush1.xpose.msra.mxu0 0.0
    %543 = vmatprep.subr.mxu0 0.0
    %544 = vmatpush1.xpose.msra.mxu0 0.0
    %545 = vmatprep.subr.mxu0 0.0
    %546 = vmatpush1.xpose.msra.mxu0 0.0
    %547 = vmatprep.subr.mxu0 0.0
    %548 = vmatpush1.xpose.msra.mxu0 0.0
    %549 = vmatprep.subr.mxu0 0.0
    %550 = vmatpush1.xpose.msra.mxu0 0.0
    %551 = vmatprep.subr.mxu0 0.0
    %552 = vmatpush1.xpose.msra.mxu0 0.0
    %553 = vmatprep.subr.mxu0 0.0
    %554 = vmatpush1.xpose.msra.mxu0 0.0
    %555 = vmatprep.subr.mxu0 0.0
    %556 = vmatpush1.xpose.msra.mxu0 0.0
    %557 = vmatprep.subr.mxu0 0.0
    %558 = vmatpush1.xpose.msra.mxu0 0.0
    %559 = vmatprep.subr.mxu0 0.0
    %560 = vmatpush1.xpose.msra.mxu0 0.0
    %561 = vmatprep.subr.mxu0 0.0
    %562 = vmatpush1.xpose.msra.mxu0 %v529
    %563 = vmatprep.subr.mxu0 0.0
    %564 = vmatpush2.xpose.msra.mxu0 0.0
    %565 = vmatprep.subr.mxu0 0.0
    %566 = vmatpush2.xpose.msra.mxu0 0.0
    %567 = vmatprep.subr.mxu0 0.0
    %568 = vmatpush2.xpose.msra.mxu0 0.0
    %569 = vmatprep.subr.mxu0 0.0
    %570 = vmatpush2.xpose.msra.mxu0 0.0
    %571 = vmatprep.subr.mxu0 0.0
    %572 = vmatpush2.xpose.msra.mxu0 0.0
    %573 = vmatprep.subr.mxu0 0.0
    %574 = vmatpush2.xpose.msra.mxu0 0.0
    %575 = vmatprep.subr.mxu0 0.0
    %576 = vmatpush2.xpose.msra.mxu0 0.0
    %577 = vmatprep.subr.mxu0 0.0
    %578 = vmatpush2.xpose.msra.mxu0 0.0
    %579 = vmatprep.subr.mxu0 0.0
    %580 = vmatpush2.xpose.msra.mxu0 0.0
    %581 = vmatprep.subr.mxu0 0.0
    %582 = vmatpush2.xpose.msra.mxu0 0.0
    %583 = vmatprep.subr.mxu0 0.0
    %584 = vmatpush2.xpose.msra.mxu0 0.0
    %585 = vmatprep.subr.mxu0 0.0
    %586 = vmatpush2.xpose.msra.mxu0 0.0
    %587 = vmatprep.subr.mxu0 0.0
    %588 = vmatpush2.xpose.msra.mxu0 0.0
    %589 = vmatprep.subr.mxu0 0.0
    %590 = vmatpush2.xpose.msra.mxu0 0.0
    %591 = vmatprep.subr.mxu0 0.0
    %592 = vmatpush2.xpose.msra.mxu0 0.0
    %593 = vmatprep.subr.mxu0 0.0
    %594 = vmatpush2.xpose.msra.mxu0 0.0
    %595 = vmatprep.mubr.f32.mxu0 0.0
    %596 = vmatmul.mubr.f32.gmra.mxu0 %v527
    %v597 = vpop.f32.mrf.mxu0
    %v598 = vadd.f32 0.0, %v597
    %v599 = vpop.f32.mrf.mxu0
    %600 = vdwg.mxu0
    %601 = vrot.lane.b32.xlu0 %v215, 96
    %v602 = vpop.permute.xlu0 %601
    %v603 = vsel %vm222, %v215, 0
    %v605 = vsel %vm222, %v602, 0
    %607 = vmatprep.subr.mxu0 0.0
    %608 = vmatpush1.xpose.msra.mxu0 0.0
    %609 = vmatprep.subr.mxu0 0.0
    %610 = vmatpush1.xpose.msra.mxu0 0.0
    %611 = vmatprep.subr.mxu0 0.0
    %612 = vmatpush1.xpose.msra.mxu0 0.0
    %613 = vmatprep.subr.mxu0 0.0
    %614 = vmatpush1.xpose.msra.mxu0 0.0
    %615 = vmatprep.subr.mxu0 0.0
    %616 = vmatpush1.xpose.msra.mxu0 0.0
    %617 = vmatprep.subr.mxu0 0.0
    %618 = vmatpush1.xpose.msra.mxu0 0.0
    %619 = vmatprep.subr.mxu0 0.0
    %620 = vmatpush1.xpose.msra.mxu0 0.0
    %621 = vmatprep.subr.mxu0 0.0
    %622 = vmatpush1.xpose.msra.mxu0 0.0
    %623 = vmatprep.subr.mxu0 0.0
    %624 = vmatpush1.xpose.msra.mxu0 0.0
    %625 = vmatprep.subr.mxu0 0.0
    %626 = vmatpush1.xpose.msra.mxu0 0.0
    %627 = vmatprep.subr.mxu0 0.0
    %628 = vmatpush1.xpose.msra.mxu0 0.0
    %629 = vmatprep.subr.mxu0 0.0
    %630 = vmatpush1.xpose.msra.mxu0 0.0
    %631 = vmatprep.subr.mxu0 0.0
    %632 = vmatpush1.xpose.msra.mxu0 0.0
    %633 = vmatprep.subr.mxu0 0.0
    %634 = vmatpush1.xpose.msra.mxu0 0.0
    %635 = vmatprep.subr.mxu0 0.0
    %636 = vmatpush1.xpose.msra.mxu0 0.0
    %637 = vmatprep.subr.mxu0 0.0
    %638 = vmatpush1.xpose.msra.mxu0 %v605
    %639 = vmatprep.subr.mxu0 0.0
    %640 = vmatpush2.xpose.msra.mxu0 0.0
    %641 = vmatprep.subr.mxu0 0.0
    %642 = vmatpush2.xpose.msra.mxu0 0.0
    %643 = vmatprep.subr.mxu0 0.0
    %644 = vmatpush2.xpose.msra.mxu0 0.0
    %645 = vmatprep.subr.mxu0 0.0
    %646 = vmatpush2.xpose.msra.mxu0 0.0
    %647 = vmatprep.subr.mxu0 0.0
    %648 = vmatpush2.xpose.msra.mxu0 0.0
    %649 = vmatprep.subr.mxu0 0.0
    %650 = vmatpush2.xpose.msra.mxu0 0.0
    %651 = vmatprep.subr.mxu0 0.0
    %652 = vmatpush2.xpose.msra.mxu0 0.0
    %653 = vmatprep.subr.mxu0 0.0
    %654 = vmatpush2.xpose.msra.mxu0 0.0
    %655 = vmatprep.subr.mxu0 0.0
    %656 = vmatpush2.xpose.msra.mxu0 0.0
    %657 = vmatprep.subr.mxu0 0.0
    %658 = vmatpush2.xpose.msra.mxu0 0.0
    %659 = vmatprep.subr.mxu0 0.0
    %660 = vmatpush2.xpose.msra.mxu0 0.0
    %661 = vmatprep.subr.mxu0 0.0
    %662 = vmatpush2.xpose.msra.mxu0 0.0
    %663 = vmatprep.subr.mxu0 0.0
    %664 = vmatpush2.xpose.msra.mxu0 0.0
    %665 = vmatprep.subr.mxu0 0.0
    %666 = vmatpush2.xpose.msra.mxu0 0.0
    %667 = vmatprep.subr.mxu0 0.0
    %668 = vmatpush2.xpose.msra.mxu0 0.0
    %669 = vmatprep.subr.mxu0 0.0
    %670 = vmatpush2.xpose.msra.mxu0 0.0
    %671 = vmatprep.mubr.f32.mxu0 0.0
    %672 = vmatmul.mubr.f32.gmra.mxu0 %v603
    %v673 = vpop.f32.mrf.mxu0
    %v674 = vadd.f32 0.0, %v673
    %v675 = vpop.f32.mrf.mxu0
    %676 = vdwg.mxu0
    %677 = vrot.lane.b32.xlu0 %v217, 96
    %v678 = vpop.permute.xlu0 %677
    %v679 = vsel %vm222, %v217, 0
    %v681 = vsel %vm222, %v678, 0
    %683 = vmatprep.subr.mxu0 0.0
    %684 = vmatpush1.xpose.msra.mxu0 0.0
    %685 = vmatprep.subr.mxu0 0.0
    %686 = vmatpush1.xpose.msra.mxu0 0.0
    %687 = vmatprep.subr.mxu0 0.0
    %688 = vmatpush1.xpose.msra.mxu0 0.0
    %689 = vmatprep.subr.mxu0 0.0
    %690 = vmatpush1.xpose.msra.mxu0 0.0
    %691 = vmatprep.subr.mxu0 0.0
    %692 = vmatpush1.xpose.msra.mxu0 0.0
    %693 = vmatprep.subr.mxu0 0.0
    %694 = vmatpush1.xpose.msra.mxu0 0.0
    %695 = vmatprep.subr.mxu0 0.0
    %696 = vmatpush1.xpose.msra.mxu0 0.0
    %697 = vmatprep.subr.mxu0 0.0
    %698 = vmatpush1.xpose.msra.mxu0 0.0
    %699 = vmatprep.subr.mxu0 0.0
    %700 = vmatpush1.xpose.msra.mxu0 0.0
    %701 = vmatprep.subr.mxu0 0.0
    %702 = vmatpush1.xpose.msra.mxu0 0.0
    %703 = vmatprep.subr.mxu0 0.0
    %704 = vmatpush1.xpose.msra.mxu0 0.0
    %705 = vmatprep.subr.mxu0 0.0
    %706 = vmatpush1.xpose.msra.mxu0 0.0
    %707 = vmatprep.subr.mxu0 0.0
    %708 = vmatpush1.xpose.msra.mxu0 0.0
    %709 = vmatprep.subr.mxu0 0.0
    %710 = vmatpush1.xpose.msra.mxu0 0.0
    %711 = vmatprep.subr.mxu0 0.0
    %712 = vmatpush1.xpose.msra.mxu0 0.0
    %713 = vmatprep.subr.mxu0 0.0
    %714 = vmatpush1.xpose.msra.mxu0 %v681
    %715 = vmatprep.subr.mxu0 0.0
    %716 = vmatpush2.xpose.msra.mxu0 0.0
    %717 = vmatprep.subr.mxu0 0.0
    %718 = vmatpush2.xpose.msra.mxu0 0.0
    %719 = vmatprep.subr.mxu0 0.0
    %720 = vmatpush2.xpose.msra.mxu0 0.0
    %721 = vmatprep.subr.mxu0 0.0
    %722 = vmatpush2.xpose.msra.mxu0 0.0
    %723 = vmatprep.subr.mxu0 0.0
    %724 = vmatpush2.xpose.msra.mxu0 0.0
    %725 = vmatprep.subr.mxu0 0.0
    %726 = vmatpush2.xpose.msra.mxu0 0.0
    %727 = vmatprep.subr.mxu0 0.0
    %728 = vmatpush2.xpose.msra.mxu0 0.0
    %729 = vmatprep.subr.mxu0 0.0
    %730 = vmatpush2.xpose.msra.mxu0 0.0
    %731 = vmatprep.subr.mxu0 0.0
    %732 = vmatpush2.xpose.msra.mxu0 0.0
    %733 = vmatprep.subr.mxu0 0.0
    %734 = vmatpush2.xpose.msra.mxu0 0.0
    %735 = vmatprep.subr.mxu0 0.0
    %736 = vmatpush2.xpose.msra.mxu0 0.0
    %737 = vmatprep.subr.mxu0 0.0
    %738 = vmatpush2.xpose.msra.mxu0 0.0
    %739 = vmatprep.subr.mxu0 0.0
    %740 = vmatpush2.xpose.msra.mxu0 0.0
    %741 = vmatprep.subr.mxu0 0.0
    %742 = vmatpush2.xpose.msra.mxu0 0.0
    %743 = vmatprep.subr.mxu0 0.0
    %744 = vmatpush2.xpose.msra.mxu0 0.0
    %745 = vmatprep.subr.mxu0 0.0
    %746 = vmatpush2.xpose.msra.mxu0 0.0
    %747 = vmatprep.mubr.f32.mxu0 0.0
    %748 = vmatmul.mubr.f32.gmra.mxu0 %v679
    %v749 = vpop.f32.mrf.mxu0
    %v750 = vadd.f32 0.0, %v749
    %v751 = vpop.f32.mrf.mxu0
    %752 = vdwg.mxu0
    %753 = vrot.lane.b32.xlu0 %v219, 96
    %v754 = vpop.permute.xlu0 %753
    %v755 = vsel %vm222, %v219, 0
    %v757 = vsel %vm222, %v754, 0
    %759 = vmatprep.subr.mxu0 0.0
    %760 = vmatpush1.xpose.msra.mxu0 0.0
    %761 = vmatprep.subr.mxu0 0.0
    %762 = vmatpush1.xpose.msra.mxu0 0.0
    %763 = vmatprep.subr.mxu0 0.0
    %764 = vmatpush1.xpose.msra.mxu0 0.0
    %765 = vmatprep.subr.mxu0 0.0
    %766 = vmatpush1.xpose.msra.mxu0 0.0
    %767 = vmatprep.subr.mxu0 0.0
    %768 = vmatpush1.xpose.msra.mxu0 0.0
    %769 = vmatprep.subr.mxu0 0.0
    %770 = vmatpush1.xpose.msra.mxu0 0.0
    %771 = vmatprep.subr.mxu0 0.0
    %772 = vmatpush1.xpose.msra.mxu0 0.0
    %773 = vmatprep.subr.mxu0 0.0
    %774 = vmatpush1.xpose.msra.mxu0 0.0
    %775 = vmatprep.subr.mxu0 0.0
    %776 = vmatpush1.xpose.msra.mxu0 0.0
    %777 = vmatprep.subr.mxu0 0.0
    %778 = vmatpush1.xpose.msra.mxu0 0.0
    %779 = vmatprep.subr.mxu0 0.0
    %780 = vmatpush1.xpose.msra.mxu0 0.0
    %781 = vmatprep.subr.mxu0 0.0
    %782 = vmatpush1.xpose.msra.mxu0 0.0
    %783 = vmatprep.subr.mxu0 0.0
    %784 = vmatpush1.xpose.msra.mxu0 0.0
    %785 = vmatprep.subr.mxu0 0.0
    %786 = vmatpush1.xpose.msra.mxu0 0.0
    %787 = vmatprep.subr.mxu0 0.0
    %788 = vmatpush1.xpose.msra.mxu0 0.0
    %789 = vmatprep.subr.mxu0 0.0
    %790 = vmatpush1.xpose.msra.mxu0 %v757
    %791 = vmatprep.subr.mxu0 0.0
    %792 = vmatpush2.xpose.msra.mxu0 0.0
    %793 = vmatprep.subr.mxu0 0.0
    %794 = vmatpush2.xpose.msra.mxu0 0.0
    %795 = vmatprep.subr.mxu0 0.0
    %796 = vmatpush2.xpose.msra.mxu0 0.0
    %797 = vmatprep.subr.mxu0 0.0
    %798 = vmatpush2.xpose.msra.mxu0 0.0
    %799 = vmatprep.subr.mxu0 0.0
    %800 = vmatpush2.xpose.msra.mxu0 0.0
    %801 = vmatprep.subr.mxu0 0.0
    %802 = vmatpush2.xpose.msra.mxu0 0.0
    %803 = vmatprep.subr.mxu0 0.0
    %804 = vmatpush2.xpose.msra.mxu0 0.0
    %805 = vmatprep.subr.mxu0 0.0
    %806 = vmatpush2.xpose.msra.mxu0 0.0
    %807 = vmatprep.subr.mxu0 0.0
    %808 = vmatpush2.xpose.msra.mxu0 0.0
    %809 = vmatprep.subr.mxu0 0.0
    %810 = vmatpush2.xpose.msra.mxu0 0.0
    %811 = vmatprep.subr.mxu0 0.0
    %812 = vmatpush2.xpose.msra.mxu0 0.0
    %813 = vmatprep.subr.mxu0 0.0
    %814 = vmatpush2.xpose.msra.mxu0 0.0
    %815 = vmatprep.subr.mxu0 0.0
    %816 = vmatpush2.xpose.msra.mxu0 0.0
    %817 = vmatprep.subr.mxu0 0.0
    %818 = vmatpush2.xpose.msra.mxu0 0.0
    %819 = vmatprep.subr.mxu0 0.0
    %820 = vmatpush2.xpose.msra.mxu0 0.0
    %821 = vmatprep.subr.mxu0 0.0
    %822 = vmatpush2.xpose.msra.mxu0 0.0
    %823 = vmatprep.mubr.f32.mxu0 0.0
    %824 = vmatmul.mubr.f32.gmra.mxu0 %v755
    %v825 = vpop.f32.mrf.mxu0
    %v826 = vadd.f32 0.0, %v825
    %v827 = vpop.f32.mrf.mxu0
    %828 = vdwg.mxu0
    %v829 = vmul.f32 %v294, 0.35355338
    %v830 = vmul.f32 %v370, 0.35355338
    %v831 = vmul.f32 %v446, 0.35355338
    %v832 = vmul.f32 %v522, 0.35355338
    %v833 = vmul.f32 %v598, 0.35355338
    %v834 = vmul.f32 %v674, 0.35355338
    %v835 = vmul.f32 %v750, 0.35355338
    %v836 = vmul.f32 %v826, 0.35355338
    %v837 = vsel %vm222, %v829, -inf
    %838 = vmax.xlane.f32.xlu0 %v837
    %v839 = vpop.xlane.xlu0 %838
    %v840 = vsel %vm222, %v830, -inf
    %841 = vmax.xlane.f32.xlu0 %v840
    %v842 = vpop.xlane.xlu0 %841
    %v843 = vsel %vm222, %v831, -inf
    %844 = vmax.xlane.f32.xlu0 %v843
    %v845 = vpop.xlane.xlu0 %844
    %v846 = vsel %vm222, %v832, -inf
    %847 = vmax.xlane.f32.xlu0 %v846
    %v848 = vpop.xlane.xlu0 %847
    %v849 = vsel %vm222, %v833, -inf
    %850 = vmax.xlane.f32.xlu0 %v849
    %v851 = vpop.xlane.xlu0 %850
    %v852 = vsel %vm222, %v834, -inf
    %853 = vmax.xlane.f32.xlu0 %v852
    %v854 = vpop.xlane.xlu0 %853
    %v855 = vsel %vm222, %v835, -inf
    %856 = vmax.xlane.f32.xlu0 %v855
    %v857 = vpop.xlane.xlu0 %856
    %v858 = vsel %vm222, %v836, -inf
    %859 = vmax.xlane.f32.xlu0 %v858
    %v860 = vpop.xlane.xlu0 %859
    %v861 = vsub.f32 %v829, %v839
    %v862 = vsub.f32 %v830, %v842
    %v863 = vsub.f32 %v831, %v845
    %v864 = vsub.f32 %v832, %v848
    %v865 = vsub.f32 %v833, %v851
    %v866 = vsub.f32 %v834, %v854
    %v867 = vsub.f32 %v835, %v857
    %v868 = vsub.f32 %v836, %v860
    %v869 = vmul.f32 %v861, 1.442695
    %v870 = vpow.pop %v869
    %v871 = vmul.f32 %v862, 1.442695
    %v872 = vpow.pop %v871
    %v873 = vmul.f32 %v863, 1.442695
    %v874 = vpow.pop %v873
    %v875 = vmul.f32 %v864, 1.442695
    %v876 = vpow.pop %v875
    %v877 = vmul.f32 %v865, 1.442695
    %v878 = vpow.pop %v877
    %v879 = vmul.f32 %v866, 1.442695
    %v880 = vpow.pop %v879
    %v881 = vmul.f32 %v867, 1.442695
    %v882 = vpow.pop %v881
    %v883 = vmul.f32 %v868, 1.442695
    %v884 = vpow.pop %v883
    %v885 = vsel %vm222, %v870, 0.0
    %886 = vadd.xlane.f32.xlu0 %v885
    %v887 = vpop.xlane.xlu0 %886
    %v888 = vsel %vm222, %v872, 0.0
    %889 = vadd.xlane.f32.xlu0 %v888
    %v890 = vpop.xlane.xlu0 %889
    %v891 = vsel %vm222, %v874, 0.0
    %892 = vadd.xlane.f32.xlu0 %v891
    %v893 = vpop.xlane.xlu0 %892
    %v894 = vsel %vm222, %v876, 0.0
    %895 = vadd.xlane.f32.xlu0 %v894
    %v896 = vpop.xlane.xlu0 %895
    %v897 = vsel %vm222, %v878, 0.0
    %898 = vadd.xlane.f32.xlu0 %v897
    %v899 = vpop.xlane.xlu0 %898
    %v900 = vsel %vm222, %v880, 0.0
    %901 = vadd.xlane.f32.xlu0 %v900
    %v902 = vpop.xlane.xlu0 %901
    %v903 = vsel %vm222, %v882, 0.0
    %904 = vadd.xlane.f32.xlu0 %v903
    %v905 = vpop.xlane.xlu0 %904
    %v906 = vsel %vm222, %v884, 0.0
    %907 = vadd.xlane.f32.xlu0 %v906
    %v908 = vpop.xlane.xlu0 %907
    %v909 = vrcp.pop %v887
    %v910 = vmul.f32 1.0, %v909
    %v911 = vrcp.pop %v890
    %v912 = vmul.f32 1.0, %v911
    %v913 = vrcp.pop %v893
    %v914 = vmul.f32 1.0, %v913
    %v915 = vrcp.pop %v896
    %v916 = vmul.f32 1.0, %v915
    %v917 = vrcp.pop %v899
    %v918 = vmul.f32 1.0, %v917
    %v919 = vrcp.pop %v902
    %v920 = vmul.f32 1.0, %v919
    %v921 = vrcp.pop %v905
    %v922 = vmul.f32 1.0, %v921
    %v923 = vrcp.pop %v908
    %v924 = vmul.f32 1.0, %v923
    %v925 = vmul.f32 %v870, %v910
    %v926 = vmul.f32 %v872, %v912
    %v927 = vmul.f32 %v874, %v914
    %v928 = vmul.f32 %v876, %v916
    %v929 = vmul.f32 %v878, %v918
    %v930 = vmul.f32 %v880, %v920
    %v931 = vmul.f32 %v882, %v922
    %v932 = vmul.f32 %v884, %v924
    %933 = vrot.lane.b32.xlu0 %v198, 64
    %v934 = vpop.permute.xlu0 %933
    %v937 = vsel %vm222, %v925, 0
    %939 = vmatprep.subr.mxu0 0.0
    %940 = vmatpush1.msra.mxu0 0.0
    %941 = vmatprep.subr.mxu0 0.0
    %942 = vmatpush1.msra.mxu0 0.0
    %943 = vmatprep.subr.mxu0 0.0
    %944 = vmatpush1.msra.mxu0 0.0
    %945 = vmatprep.subr.mxu0 0.0
    %946 = vmatpush1.msra.mxu0 0.0
    %947 = vmatprep.subr.mxu0 0.0
    %948 = vmatpush1.msra.mxu0 0.0
    %949 = vmatprep.subr.mxu0 0.0
    %950 = vmatpush1.msra.mxu0 0.0
    %951 = vmatprep.subr.mxu0 0.0
    %952 = vmatpush1.msra.mxu0 0.0
    %953 = vmatprep.subr.mxu0 0.0
    %954 = vmatpush1.msra.mxu0 0.0
    %955 = vmatprep.subr.mxu0 0.0
    %956 = vmatpush1.msra.mxu0 0.0
    %957 = vmatprep.subr.mxu0 0.0
    %958 = vmatpush1.msra.mxu0 0.0
    %959 = vmatprep.subr.mxu0 0.0
    %960 = vmatpush1.msra.mxu0 0.0
    %961 = vmatprep.subr.mxu0 0.0
    %962 = vmatpush1.msra.mxu0 0.0
    %963 = vmatprep.subr.mxu0 0.0
    %964 = vmatpush1.msra.mxu0 0.0
    %965 = vmatprep.subr.mxu0 0.0
    %966 = vmatpush1.msra.mxu0 0.0
    %967 = vmatprep.subr.mxu0 0.0
    %968 = vmatpush1.msra.mxu0 0.0
    %969 = vmatprep.subr.mxu0 0.0
    %970 = vmatpush1.msra.mxu0 %v934
    %971 = vmatprep.subr.mxu0 0.0
    %972 = vmatpush2.msra.mxu0 0.0
    %973 = vmatprep.subr.mxu0 0.0
    %974 = vmatpush2.msra.mxu0 0.0
    %975 = vmatprep.subr.mxu0 0.0
    %976 = vmatpush2.msra.mxu0 0.0
    %977 = vmatprep.subr.mxu0 0.0
    %978 = vmatpush2.msra.mxu0 0.0
    %979 = vmatprep.subr.mxu0 0.0
    %980 = vmatpush2.msra.mxu0 0.0
    %981 = vmatprep.subr.mxu0 0.0
    %982 = vmatpush2.msra.mxu0 0.0
    %983 = vmatprep.subr.mxu0 0.0
    %984 = vmatpush2.msra.mxu0 0.0
    %985 = vmatprep.subr.mxu0 0.0
    %986 = vmatpush2.msra.mxu0 0.0
    %987 = vmatprep.subr.mxu0 0.0
    %988 = vmatpush2.msra.mxu0 0.0
    %989 = vmatprep.subr.mxu0 0.0
    %990 = vmatpush2.msra.mxu0 0.0
    %991 = vmatprep.subr.mxu0 0.0
    %992 = vmatpush2.msra.mxu0 0.0
    %993 = vmatprep.subr.mxu0 0.0
    %994 = vmatpush2.msra.mxu0 0.0
    %995 = vmatprep.subr.mxu0 0.0
    %996 = vmatpush2.msra.mxu0 0.0
    %997 = vmatprep.subr.mxu0 0.0
    %998 = vmatpush2.msra.mxu0 0.0
    %999 = vmatprep.subr.mxu0 0.0
    %1000 = vmatpush2.msra.mxu0 0.0
    %1001 = vmatprep.subr.mxu0 0.0
    %1002 = vmatpush2.msra.mxu0 0.0
    %1003 = vmatprep.mubr.f32.mxu0 0.0
    %1004 = vmatmul.mubr.f32.gmra.mxu0 %v937
    %v1005 = vpop.f32.mrf.mxu0
    %v1006 = vadd.f32 0.0, %v1005
    %v1007 = vpop.f32.mrf.mxu0
    %1008 = vdwg.mxu0
    %1009 = vrot.lane.b32.xlu0 %v203, 64
    %v1010 = vpop.permute.xlu0 %1009
    %v1013 = vsel %vm222, %v926, 0
    %1015 = vmatprep.subr.mxu0 0.0
    %1016 = vmatpush1.msra.mxu0 0.0
    %1017 = vmatprep.subr.mxu0 0.0
    %1018 = vmatpush1.msra.mxu0 0.0
    %1019 = vmatprep.subr.mxu0 0.0
    %1020 = vmatpush1.msra.mxu0 0.0
    %1021 = vmatprep.subr.mxu0 0.0
    %1022 = vmatpush1.msra.mxu0 0.0
    %1023 = vmatprep.subr.mxu0 0.0
    %1024 = vmatpush1.msra.mxu0 0.0
    %1025 = vmatprep.subr.mxu0 0.0
    %1026 = vmatpush1.msra.mxu0 0.0
    %1027 = vmatprep.subr.mxu0 0.0
    %1028 = vmatpush1.msra.mxu0 0.0
    %1029 = vmatprep.subr.mxu0 0.0
    %1030 = vmatpush1.msra.mxu0 0.0
    %1031 = vmatprep.subr.mxu0 0.0
    %1032 = vmatpush1.msra.mxu0 0.0
    %1033 = vmatprep.subr.mxu0 0.0
    %1034 = vmatpush1.msra.mxu0 0.0
    %1035 = vmatprep.subr.mxu0 0.0
    %1036 = vmatpush1.msra.mxu0 0.0
    %1037 = vmatprep.subr.mxu0 0.0
    %1038 = vmatpush1.msra.mxu0 0.0
    %1039 = vmatprep.subr.mxu0 0.0
    %1040 = vmatpush1.msra.mxu0 0.0
    %1041 = vmatprep.subr.mxu0 0.0
    %1042 = vmatpush1.msra.mxu0 0.0
    %1043 = vmatprep.subr.mxu0 0.0
    %1044 = vmatpush1.msra.mxu0 0.0
    %1045 = vmatprep.subr.mxu0 0.0
    %1046 = vmatpush1.msra.mxu0 %v1010
    %1047 = vmatprep.subr.mxu0 0.0
    %1048 = vmatpush2.msra.mxu0 0.0
    %1049 = vmatprep.subr.mxu0 0.0
    %1050 = vmatpush2.msra.mxu0 0.0
    %1051 = vmatprep.subr.mxu0 0.0
    %1052 = vmatpush2.msra.mxu0 0.0
    %1053 = vmatprep.subr.mxu0 0.0
    %1054 = vmatpush2.msra.mxu0 0.0
    %1055 = vmatprep.subr.mxu0 0.0
    %1056 = vmatpush2.msra.mxu0 0.0
    %1057 = vmatprep.subr.mxu0 0.0
    %1058 = vmatpush2.msra.mxu0 0.0
    %1059 = vmatprep.subr.mxu0 0.0
    %1060 = vmatpush2.msra.mxu0 0.0
    %1061 = vmatprep.subr.mxu0 0.0
    %1062 = vmatpush2.msra.mxu0 0.0
    %1063 = vmatprep.subr.mxu0 0.0
    %1064 = vmatpush2.msra.mxu0 0.0
    %1065 = vmatprep.subr.mxu0 0.0
    %1066 = vmatpush2.msra.mxu0 0.0
    %1067 = vmatprep.subr.mxu0 0.0
    %1068 = vmatpush2.msra.mxu0 0.0
    %1069 = vmatprep.subr.mxu0 0.0
    %1070 = vmatpush2.msra.mxu0 0.0
    %1071 = vmatprep.subr.mxu0 0.0
    %1072 = vmatpush2.msra.mxu0 0.0
    %1073 = vmatprep.subr.mxu0 0.0
    %1074 = vmatpush2.msra.mxu0 0.0
    %1075 = vmatprep.subr.mxu0 0.0
    %1076 = vmatpush2.msra.mxu0 0.0
    %1077 = vmatprep.subr.mxu0 0.0
    %1078 = vmatpush2.msra.mxu0 0.0
    %1079 = vmatprep.mubr.f32.mxu0 0.0
    %1080 = vmatmul.mubr.f32.gmra.mxu0 %v1013
    %v1081 = vpop.f32.mrf.mxu0
    %v1082 = vadd.f32 0.0, %v1081
    %v1083 = vpop.f32.mrf.mxu0
    %1084 = vdwg.mxu0
    %1085 = vrot.lane.b32.xlu0 %v209, 64
    %v1086 = vpop.permute.xlu0 %1085
    %v1089 = vsel %vm222, %v927, 0
    %1091 = vmatprep.subr.mxu0 0.0
    %1092 = vmatpush1.msra.mxu0 0.0
    %1093 = vmatprep.subr.mxu0 0.0
    %1094 = vmatpush1.msra.mxu0 0.0
    %1095 = vmatprep.subr.mxu0 0.0
    %1096 = vmatpush1.msra.mxu0 0.0
    %1097 = vmatprep.subr.mxu0 0.0
    %1098 = vmatpush1.msra.mxu0 0.0
    %1099 = vmatprep.subr.mxu0 0.0
    %1100 = vmatpush1.msra.mxu0 0.0
    %1101 = vmatprep.subr.mxu0 0.0
    %1102 = vmatpush1.msra.mxu0 0.0
    %1103 = vmatprep.subr.mxu0 0.0
    %1104 = vmatpush1.msra.mxu0 0.0
    %1105 = vmatprep.subr.mxu0 0.0
    %1106 = vmatpush1.msra.mxu0 0.0
    %1107 = vmatprep.subr.mxu0 0.0
    %1108 = vmatpush1.msra.mxu0 0.0
    %1109 = vmatprep.subr.mxu0 0.0
    %1110 = vmatpush1.msra.mxu0 0.0
    %1111 = vmatprep.subr.mxu0 0.0
    %1112 = vmatpush1.msra.mxu0 0.0
    %1113 = vmatprep.subr.mxu0 0.0
    %1114 = vmatpush1.msra.mxu0 0.0
    %1115 = vmatprep.subr.mxu0 0.0
    %1116 = vmatpush1.msra.mxu0 0.0
    %1117 = vmatprep.subr.mxu0 0.0
    %1118 = vmatpush1.msra.mxu0 0.0
    %1119 = vmatprep.subr.mxu0 0.0
    %1120 = vmatpush1.msra.mxu0 0.0
    %1121 = vmatprep.subr.mxu0 0.0
    %1122 = vmatpush1.msra.mxu0 %v1086
    %1123 = vmatprep.subr.mxu0 0.0
    %1124 = vmatpush2.msra.mxu0 0.0
    %1125 = vmatprep.subr.mxu0 0.0
    %1126 = vmatpush2.msra.mxu0 0.0
    %1127 = vmatprep.subr.mxu0 0.0
    %1128 = vmatpush2.msra.mxu0 0.0
    %1129 = vmatprep.subr.mxu0 0.0
    %1130 = vmatpush2.msra.mxu0 0.0
    %1131 = vmatprep.subr.mxu0 0.0
    %1132 = vmatpush2.msra.mxu0 0.0
    %1133 = vmatprep.subr.mxu0 0.0
    %1134 = vmatpush2.msra.mxu0 0.0
    %1135 = vmatprep.subr.mxu0 0.0
    %1136 = vmatpush2.msra.mxu0 0.0
    %1137 = vmatprep.subr.mxu0 0.0
    %1138 = vmatpush2.msra.mxu0 0.0
    %1139 = vmatprep.subr.mxu0 0.0
    %1140 = vmatpush2.msra.mxu0 0.0
    %1141 = vmatprep.subr.mxu0 0.0
    %1142 = vmatpush2.msra.mxu0 0.0
    %1143 = vmatprep.subr.mxu0 0.0
    %1144 = vmatpush2.msra.mxu0 0.0
    %1145 = vmatprep.subr.mxu0 0.0
    %1146 = vmatpush2.msra.mxu0 0.0
    %1147 = vmatprep.subr.mxu0 0.0
    %1148 = vmatpush2.msra.mxu0 0.0
    %1149 = vmatprep.subr.mxu0 0.0
    %1150 = vmatpush2.msra.mxu0 0.0
    %1151 = vmatprep.subr.mxu0 0.0
    %1152 = vmatpush2.msra.mxu0 0.0
    %1153 = vmatprep.subr.mxu0 0.0
    %1154 = vmatpush2.msra.mxu0 0.0
    %1155 = vmatprep.mubr.f32.mxu0 0.0
    %1156 = vmatmul.mubr.f32.gmra.mxu0 %v1089
    %v1157 = vpop.f32.mrf.mxu0
    %v1158 = vadd.f32 0.0, %v1157
    %v1159 = vpop.f32.mrf.mxu0
    %1160 = vdwg.mxu0
    %1161 = vrot.lane.b32.xlu0 %v211, 64
    %v1162 = vpop.permute.xlu0 %1161
    %v1165 = vsel %vm222, %v928, 0
    %1167 = vmatprep.subr.mxu0 0.0
    %1168 = vmatpush1.msra.mxu0 0.0
    %1169 = vmatprep.subr.mxu0 0.0
    %1170 = vmatpush1.msra.mxu0 0.0
    %1171 = vmatprep.subr.mxu0 0.0
    %1172 = vmatpush1.msra.mxu0 0.0
    %1173 = vmatprep.subr.mxu0 0.0
    %1174 = vmatpush1.msra.mxu0 0.0
    %1175 = vmatprep.subr.mxu0 0.0
    %1176 = vmatpush1.msra.mxu0 0.0
    %1177 = vmatprep.subr.mxu0 0.0
    %1178 = vmatpush1.msra.mxu0 0.0
    %1179 = vmatprep.subr.mxu0 0.0
    %1180 = vmatpush1.msra.mxu0 0.0
    %1181 = vmatprep.subr.mxu0 0.0
    %1182 = vmatpush1.msra.mxu0 0.0
    %1183 = vmatprep.subr.mxu0 0.0
    %1184 = vmatpush1.msra.mxu0 0.0
    %1185 = vmatprep.subr.mxu0 0.0
    %1186 = vmatpush1.msra.mxu0 0.0
    %1187 = vmatprep.subr.mxu0 0.0
    %1188 = vmatpush1.msra.mxu0 0.0
    %1189 = vmatprep.subr.mxu0 0.0
    %1190 = vmatpush1.msra.mxu0 0.0
    %1191 = vmatprep.subr.mxu0 0.0
    %1192 = vmatpush1.msra.mxu0 0.0
    %1193 = vmatprep.subr.mxu0 0.0
    %1194 = vmatpush1.msra.mxu0 0.0
    %1195 = vmatprep.subr.mxu0 0.0
    %1196 = vmatpush1.msra.mxu0 0.0
    %1197 = vmatprep.subr.mxu0 0.0
    %1198 = vmatpush1.msra.mxu0 %v1162
    %1199 = vmatprep.subr.mxu0 0.0
    %1200 = vmatpush2.msra.mxu0 0.0
    %1201 = vmatprep.subr.mxu0 0.0
    %1202 = vmatpush2.msra.mxu0 0.0
    %1203 = vmatprep.subr.mxu0 0.0
    %1204 = vmatpush2.msra.mxu0 0.0
    %1205 = vmatprep.subr.mxu0 0.0
    %1206 = vmatpush2.msra.mxu0 0.0
    %1207 = vmatprep.subr.mxu0 0.0
    %1208 = vmatpush2.msra.mxu0 0.0
    %1209 = vmatprep.subr.mxu0 0.0
    %1210 = vmatpush2.msra.mxu0 0.0
    %1211 = vmatprep.subr.mxu0 0.0
    %1212 = vmatpush2.msra.mxu0 0.0
    %1213 = vmatprep.subr.mxu0 0.0
    %1214 = vmatpush2.msra.mxu0 0.0
    %1215 = vmatprep.subr.mxu0 0.0
    %1216 = vmatpush2.msra.mxu0 0.0
    %1217 = vmatprep.subr.mxu0 0.0
    %1218 = vmatpush2.msra.mxu0 0.0
    %1219 = vmatprep.subr.mxu0 0.0
    %1220 = vmatpush2.msra.mxu0 0.0
    %1221 = vmatprep.subr.mxu0 0.0
    %1222 = vmatpush2.msra.mxu0 0.0
    %1223 = vmatprep.subr.mxu0 0.0
    %1224 = vmatpush2.msra.mxu0 0.0
    %1225 = vmatprep.subr.mxu0 0.0
    %1226 = vmatpush2.msra.mxu0 0.0
    %1227 = vmatprep.subr.mxu0 0.0
    %1228 = vmatpush2.msra.mxu0 0.0
    %1229 = vmatprep.subr.mxu0 0.0
    %1230 = vmatpush2.msra.mxu0 0.0
    %1231 = vmatprep.mubr.f32.mxu0 0.0
    %1232 = vmatmul.mubr.f32.gmra.mxu0 %v1165
    %v1233 = vpop.f32.mrf.mxu0
    %v1234 = vadd.f32 0.0, %v1233
    %v1235 = vpop.f32.mrf.mxu0
    %1236 = vdwg.mxu0
    %1237 = vrot.lane.b32.xlu0 %v213, 64
    %v1238 = vpop.permute.xlu0 %1237
    %v1241 = vsel %vm222, %v929, 0
    %1243 = vmatprep.subr.mxu0 0.0
    %1244 = vmatpush1.msra.mxu0 0.0
    %1245 = vmatprep.subr.mxu0 0.0
    %1246 = vmatpush1.msra.mxu0 0.0
    %1247 = vmatprep.subr.mxu0 0.0
    %1248 = vmatpush1.msra.mxu0 0.0
    %1249 = vmatprep.subr.mxu0 0.0
    %1250 = vmatpush1.msra.mxu0 0.0
    %1251 = vmatprep.subr.mxu0 0.0
    %1252 = vmatpush1.msra.mxu0 0.0
    %1253 = vmatprep.subr.mxu0 0.0
    %1254 = vmatpush1.msra.mxu0 0.0
    %1255 = vmatprep.subr.mxu0 0.0
    %1256 = vmatpush1.msra.mxu0 0.0
    %1257 = vmatprep.subr.mxu0 0.0
    %1258 = vmatpush1.msra.mxu0 0.0
    %1259 = vmatprep.subr.mxu0 0.0
    %1260 = vmatpush1.msra.mxu0 0.0
    %1261 = vmatprep.subr.mxu0 0.0
    %1262 = vmatpush1.msra.mxu0 0.0
    %1263 = vmatprep.subr.mxu0 0.0
    %1264 = vmatpush1.msra.mxu0 0.0
    %1265 = vmatprep.subr.mxu0 0.0
    %1266 = vmatpush1.msra.mxu0 0.0
    %1267 = vmatprep.subr.mxu0 0.0
    %1268 = vmatpush1.msra.mxu0 0.0
    %1269 = vmatprep.subr.mxu0 0.0
    %1270 = vmatpush1.msra.mxu0 0.0
    %1271 = vmatprep.subr.mxu0 0.0
    %1272 = vmatpush1.msra.mxu0 0.0
    %1273 = vmatprep.subr.mxu0 0.0
    %1274 = vmatpush1.msra.mxu0 %v1238
    %1275 = vmatprep.subr.mxu0 0.0
    %1276 = vmatpush2.msra.mxu0 0.0
    %1277 = vmatprep.subr.mxu0 0.0
    %1278 = vmatpush2.msra.mxu0 0.0
    %1279 = vmatprep.subr.mxu0 0.0
    %1280 = vmatpush2.msra.mxu0 0.0
    %1281 = vmatprep.subr.mxu0 0.0
    %1282 = vmatpush2.msra.mxu0 0.0
    %1283 = vmatprep.subr.mxu0 0.0
    %1284 = vmatpush2.msra.mxu0 0.0
    %1285 = vmatprep.subr.mxu0 0.0
    %1286 = vmatpush2.msra.mxu0 0.0
    %1287 = vmatprep.subr.mxu0 0.0
    %1288 = vmatpush2.msra.mxu0 0.0
    %1289 = vmatprep.subr.mxu0 0.0
    %1290 = vmatpush2.msra.mxu0 0.0
    %1291 = vmatprep.subr.mxu0 0.0
    %1292 = vmatpush2.msra.mxu0 0.0
    %1293 = vmatprep.subr.mxu0 0.0
    %1294 = vmatpush2.msra.mxu0 0.0
    %1295 = vmatprep.subr.mxu0 0.0
    %1296 = vmatpush2.msra.mxu0 0.0
    %1297 = vmatprep.subr.mxu0 0.0
    %1298 = vmatpush2.msra.mxu0 0.0
    %1299 = vmatprep.subr.mxu0 0.0
    %1300 = vmatpush2.msra.mxu0 0.0
    %1301 = vmatprep.subr.mxu0 0.0
    %1302 = vmatpush2.msra.mxu0 0.0
    %1303 = vmatprep.subr.mxu0 0.0
    %1304 = vmatpush2.msra.mxu0 0.0
    %1305 = vmatprep.subr.mxu0 0.0
    %1306 = vmatpush2.msra.mxu0 0.0
    %1307 = vmatprep.mubr.f32.mxu0 0.0
    %1308 = vmatmul.mubr.f32.gmra.mxu0 %v1241
    %v1309 = vpop.f32.mrf.mxu0
    %v1310 = vadd.f32 0.0, %v1309
    %v1311 = vpop.f32.mrf.mxu0
    %1312 = vdwg.mxu0
    %1313 = vrot.lane.b32.xlu0 %v215, 64
    %v1314 = vpop.permute.xlu0 %1313
    %v1317 = vsel %vm222, %v930, 0
    %1319 = vmatprep.subr.mxu0 0.0
    %1320 = vmatpush1.msra.mxu0 0.0
    %1321 = vmatprep.subr.mxu0 0.0
    %1322 = vmatpush1.msra.mxu0 0.0
    %1323 = vmatprep.subr.mxu0 0.0
    %1324 = vmatpush1.msra.mxu0 0.0
    %1325 = vmatprep.subr.mxu0 0.0
    %1326 = vmatpush1.msra.mxu0 0.0
    %1327 = vmatprep.subr.mxu0 0.0
    %1328 = vmatpush1.msra.mxu0 0.0
    %1329 = vmatprep.subr.mxu0 0.0
    %1330 = vmatpush1.msra.mxu0 0.0
    %1331 = vmatprep.subr.mxu0 0.0
    %1332 = vmatpush1.msra.mxu0 0.0
    %1333 = vmatprep.subr.mxu0 0.0
    %1334 = vmatpush1.msra.mxu0 0.0
    %1335 = vmatprep.subr.mxu0 0.0
    %1336 = vmatpush1.msra.mxu0 0.0
    %1337 = vmatprep.subr.mxu0 0.0
    %1338 = vmatpush1.msra.mxu0 0.0
    %1339 = vmatprep.subr.mxu0 0.0
    %1340 = vmatpush1.msra.mxu0 0.0
    %1341 = vmatprep.subr.mxu0 0.0
    %1342 = vmatpush1.msra.mxu0 0.0
    %1343 = vmatprep.subr.mxu0 0.0
    %1344 = vmatpush1.msra.mxu0 0.0
    %1345 = vmatprep.subr.mxu0 0.0
    %1346 = vmatpush1.msra.mxu0 0.0
    %1347 = vmatprep.subr.mxu0 0.0
    %1348 = vmatpush1.msra.mxu0 0.0
    %1349 = vmatprep.subr.mxu0 0.0
    %1350 = vmatpush1.msra.mxu0 %v1314
    %1351 = vmatprep.subr.mxu0 0.0
    %1352 = vmatpush2.msra.mxu0 0.0
    %1353 = vmatprep.subr.mxu0 0.0
    %1354 = vmatpush2.msra.mxu0 0.0
    %1355 = vmatprep.subr.mxu0 0.0
    %1356 = vmatpush2.msra.mxu0 0.0
    %1357 = vmatprep.subr.mxu0 0.0
    %1358 = vmatpush2.msra.mxu0 0.0
    %1359 = vmatprep.subr.mxu0 0.0
    %1360 = vmatpush2.msra.mxu0 0.0
    %1361 = vmatprep.subr.mxu0 0.0
    %1362 = vmatpush2.msra.mxu0 0.0
    %1363 = vmatprep.subr.mxu0 0.0
    %1364 = vmatpush2.msra.mxu0 0.0
    %1365 = vmatprep.subr.mxu0 0.0
    %1366 = vmatpush2.msra.mxu0 0.0
    %1367 = vmatprep.subr.mxu0 0.0
    %1368 = vmatpush2.msra.mxu0 0.0
    %1369 = vmatprep.subr.mxu0 0.0
    %1370 = vmatpush2.msra.mxu0 0.0
    %1371 = vmatprep.subr.mxu0 0.0
    %1372 = vmatpush2.msra.mxu0 0.0
    %1373 = vmatprep.subr.mxu0 0.0
    %1374 = vmatpush2.msra.mxu0 0.0
    %1375 = vmatprep.subr.mxu0 0.0
    %1376 = vmatpush2.msra.mxu0 0.0
    %1377 = vmatprep.subr.mxu0 0.0
    %1378 = vmatpush2.msra.mxu0 0.0
    %1379 = vmatprep.subr.mxu0 0.0
    %1380 = vmatpush2.msra.mxu0 0.0
    %1381 = vmatprep.subr.mxu0 0.0
    %1382 = vmatpush2.msra.mxu0 0.0
    %1383 = vmatprep.mubr.f32.mxu0 0.0
    %1384 = vmatmul.mubr.f32.gmra.mxu0 %v1317
    %v1385 = vpop.f32.mrf.mxu0
    %v1386 = vadd.f32 0.0, %v1385
    %v1387 = vpop.f32.mrf.mxu0
    %1388 = vdwg.mxu0
    %1389 = vrot.lane.b32.xlu0 %v217, 64
    %v1390 = vpop.permute.xlu0 %1389
    %v1393 = vsel %vm222, %v931, 0
    %1395 = vmatprep.subr.mxu0 0.0
    %1396 = vmatpush1.msra.mxu0 0.0
    %1397 = vmatprep.subr.mxu0 0.0
    %1398 = vmatpush1.msra.mxu0 0.0
    %1399 = vmatprep.subr.mxu0 0.0
    %1400 = vmatpush1.msra.mxu0 0.0
    %1401 = vmatprep.subr.mxu0 0.0
    %1402 = vmatpush1.msra.mxu0 0.0
    %1403 = vmatprep.subr.mxu0 0.0
    %1404 = vmatpush1.msra.mxu0 0.0
    %1405 = vmatprep.subr.mxu0 0.0
    %1406 = vmatpush1.msra.mxu0 0.0
    %1407 = vmatprep.subr.mxu0 0.0
    %1408 = vmatpush1.msra.mxu0 0.0
    %1409 = vmatprep.subr.mxu0 0.0
    %1410 = vmatpush1.msra.mxu0 0.0
    %1411 = vmatprep.subr.mxu0 0.0
    %1412 = vmatpush1.msra.mxu0 0.0
    %1413 = vmatprep.subr.mxu0 0.0
    %1414 = vmatpush1.msra.mxu0 0.0
    %1415 = vmatprep.subr.mxu0 0.0
    %1416 = vmatpush1.msra.mxu0 0.0
    %1417 = vmatprep.subr.mxu0 0.0
    %1418 = vmatpush1.msra.mxu0 0.0
    %1419 = vmatprep.subr.mxu0 0.0
    %1420 = vmatpush1.msra.mxu0 0.0
    %1421 = vmatprep.subr.mxu0 0.0
    %1422 = vmatpush1.msra.mxu0 0.0
    %1423 = vmatprep.subr.mxu0 0.0
    %1424 = vmatpush1.msra.mxu0 0.0
    %1425 = vmatprep.subr.mxu0 0.0
    %1426 = vmatpush1.msra.mxu0 %v1390
    %1427 = vmatprep.subr.mxu0 0.0
    %1428 = vmatpush2.msra.mxu0 0.0
    %1429 = vmatprep.subr.mxu0 0.0
    %1430 = vmatpush2.msra.mxu0 0.0
    %1431 = vmatprep.subr.mxu0 0.0
    %1432 = vmatpush2.msra.mxu0 0.0
    %1433 = vmatprep.subr.mxu0 0.0
    %1434 = vmatpush2.msra.mxu0 0.0
    %1435 = vmatprep.subr.mxu0 0.0
    %1436 = vmatpush2.msra.mxu0 0.0
    %1437 = vmatprep.subr.mxu0 0.0
    %1438 = vmatpush2.msra.mxu0 0.0
    %1439 = vmatprep.subr.mxu0 0.0
    %1440 = vmatpush2.msra.mxu0 0.0
    %1441 = vmatprep.subr.mxu0 0.0
    %1442 = vmatpush2.msra.mxu0 0.0
    %1443 = vmatprep.subr.mxu0 0.0
    %1444 = vmatpush2.msra.mxu0 0.0
    %1445 = vmatprep.subr.mxu0 0.0
    %1446 = vmatpush2.msra.mxu0 0.0
    %1447 = vmatprep.subr.mxu0 0.0
    %1448 = vmatpush2.msra.mxu0 0.0
    %1449 = vmatprep.subr.mxu0 0.0
    %1450 = vmatpush2.msra.mxu0 0.0
    %1451 = vmatprep.subr.mxu0 0.0
    %1452 = vmatpush2.msra.mxu0 0.0
    %1453 = vmatprep.subr.mxu0 0.0
    %1454 = vmatpush2.msra.mxu0 0.0
    %1455 = vmatprep.subr.mxu0 0.0
    %1456 = vmatpush2.msra.mxu0 0.0
    %1457 = vmatprep.subr.mxu0 0.0
    %1458 = vmatpush2.msra.mxu0 0.0
    %1459 = vmatprep.mubr.f32.mxu0 0.0
    %1460 = vmatmul.mubr.f32.gmra.mxu0 %v1393
    %v1461 = vpop.f32.mrf.mxu0
    %v1462 = vadd.f32 0.0, %v1461
    %v1463 = vpop.f32.mrf.mxu0
    %1464 = vdwg.mxu0
    %1465 = vrot.lane.b32.xlu0 %v219, 64
    %v1466 = vpop.permute.xlu0 %1465
    %v1469 = vsel %vm222, %v932, 0
    %1471 = vmatprep.subr.mxu0 0.0
    %1472 = vmatpush1.msra.mxu0 0.0
    %1473 = vmatprep.subr.mxu0 0.0
    %1474 = vmatpush1.msra.mxu0 0.0
    %1475 = vmatprep.subr.mxu0 0.0
    %1476 = vmatpush1.msra.mxu0 0.0
    %1477 = vmatprep.subr.mxu0 0.0
    %1478 = vmatpush1.msra.mxu0 0.0
    %1479 = vmatprep.subr.mxu0 0.0
    %1480 = vmatpush1.msra.mxu0 0.0
    %1481 = vmatprep.subr.mxu0 0.0
    %1482 = vmatpush1.msra.mxu0 0.0
    %1483 = vmatprep.subr.mxu0 0.0
    %1484 = vmatpush1.msra.mxu0 0.0
    %1485 = vmatprep.subr.mxu0 0.0
    %1486 = vmatpush1.msra.mxu0 0.0
    %1487 = vmatprep.subr.mxu0 0.0
    %1488 = vmatpush1.msra.mxu0 0.0
    %1489 = vmatprep.subr.mxu0 0.0
    %1490 = vmatpush1.msra.mxu0 0.0
    %1491 = vmatprep.subr.mxu0 0.0
    %1492 = vmatpush1.msra.mxu0 0.0
    %1493 = vmatprep.subr.mxu0 0.0
    %1494 = vmatpush1.msra.mxu0 0.0
    %1495 = vmatprep.subr.mxu0 0.0
    %1496 = vmatpush1.msra.mxu0 0.0
    %1497 = vmatprep.subr.mxu0 0.0
    %1498 = vmatpush1.msra.mxu0 0.0
    %1499 = vmatprep.subr.mxu0 0.0
    %1500 = vmatpush1.msra.mxu0 0.0
    %1501 = vmatprep.subr.mxu0 0.0
    %1502 = vmatpush1.msra.mxu0 %v1466
    %1503 = vmatprep.subr.mxu0 0.0
    %1504 = vmatpush2.msra.mxu0 0.0
    %1505 = vmatprep.subr.mxu0 0.0
    %1506 = vmatpush2.msra.mxu0 0.0
    %1507 = vmatprep.subr.mxu0 0.0
    %1508 = vmatpush2.msra.mxu0 0.0
    %1509 = vmatprep.subr.mxu0 0.0
    %1510 = vmatpush2.msra.mxu0 0.0
    %1511 = vmatprep.subr.mxu0 0.0
    %1512 = vmatpush2.msra.mxu0 0.0
    %1513 = vmatprep.subr.mxu0 0.0
    %1514 = vmatpush2.msra.mxu0 0.0
    %1515 = vmatprep.subr.mxu0 0.0
    %1516 = vmatpush2.msra.mxu0 0.0
    %1517 = vmatprep.subr.mxu0 0.0
    %1518 = vmatpush2.msra.mxu0 0.0
    %1519 = vmatprep.subr.mxu0 0.0
    %1520 = vmatpush2.msra.mxu0 0.0
    %1521 = vmatprep.subr.mxu0 0.0
    %1522 = vmatpush2.msra.mxu0 0.0
    %1523 = vmatprep.subr.mxu0 0.0
    %1524 = vmatpush2.msra.mxu0 0.0
    %1525 = vmatprep.subr.mxu0 0.0
    %1526 = vmatpush2.msra.mxu0 0.0
    %1527 = vmatprep.subr.mxu0 0.0
    %1528 = vmatpush2.msra.mxu0 0.0
    %1529 = vmatprep.subr.mxu0 0.0
    %1530 = vmatpush2.msra.mxu0 0.0
    %1531 = vmatprep.subr.mxu0 0.0
    %1532 = vmatpush2.msra.mxu0 0.0
    %1533 = vmatprep.subr.mxu0 0.0
    %1534 = vmatpush2.msra.mxu0 0.0
    %1535 = vmatprep.mubr.f32.mxu0 0.0
    %1536 = vmatmul.mubr.f32.gmra.mxu0 %v1469
    %v1537 = vpop.f32.mrf.mxu0
    %v1538 = vadd.f32 0.0, %v1537
    %v1539 = vpop.f32.mrf.mxu0
    %1540 = vdwg.mxu0
    %1543 = vrot.lane.b32.xlu0 %v1158, 8
    %v1544 = vpop.permute.xlu0 %1543
    %1545 = vrot.lane.b32.xlu0 %v1234, 8
    %v1546 = vpop.permute.xlu0 %1545
    %1551 = vrot.lane.b32.xlu0 %v1310, 16
    %v1552 = vpop.permute.xlu0 %1551
    %1553 = vrot.lane.b32.xlu0 %v1386, 16
    %v1554 = vpop.permute.xlu0 %1553
    %1559 = vrot.lane.b32.xlu0 %v1462, 24
    %v1560 = vpop.permute.xlu0 %1559
    %1561 = vrot.lane.b32.xlu0 %v1538, 24
    %v1562 = vpop.permute.xlu0 %1561
    %v1565 = vsel %vm222, %v1006, %v1544
    %v1566 = vsel %vm222, %v1082, %v1546
    %vm1567 = vcmask 130048
    %v1568 = vsel %vm1567, %v1565, %v1552
    %v1569 = vsel %vm1567, %v1566, %v1554
    %vm1570 = vcmask 195584
    %v1571 = vsel %vm1570, %v1568, %v1560
    %v1572 = vsel %vm1570, %v1569, %v1562
    %v1573 = vld [vmem:[%s5] sm:$0xff]
    %v1574 = vld [vmem:[%s5 + $0x8] sm:$0xff]
    %v1575 = vld [vmem:[%s5 + $0x10] sm:$0xff]
    %v1576 = vld [vmem:[%s5 + $0x18] sm:$0xff]
    %v1577 = vld [vmem:[%s6] sm:$0x1]
    %v1579 = vlaneseq
    %v1580 = vshrl.u32 %v1579, 7
    %v1581 = vsub.s32 0, %v1580
    %v1582 = vrot.slane %v1577, %v1581
    %v1585 = vsel %vm70, %v1571, 0
    %v1588 = vsel %vm70, %v1572, 0
    %1590 = vmatprep.subr.mxu0 0.0
    %1591 = vmatpush1.msra.mxu0 0.0
    %1592 = vmatprep.subr.mxu0 0.0
    %1593 = vmatpush1.msra.mxu0 0.0
    %1594 = vmatprep.subr.mxu0 0.0
    %1595 = vmatpush1.msra.mxu0 0.0
    %1596 = vmatprep.subr.mxu0 0.0
    %1597 = vmatpush1.msra.mxu0 0.0
    %1598 = vmatprep.subr.mxu0 0.0
    %1599 = vmatpush1.msra.mxu0 0.0
    %1600 = vmatprep.subr.mxu0 0.0
    %1601 = vmatpush1.msra.mxu0 0.0
    %1602 = vmatprep.subr.mxu0 0.0
    %1603 = vmatpush1.msra.mxu0 0.0
    %1604 = vmatprep.subr.mxu0 0.0
    %1605 = vmatpush1.msra.mxu0 0.0
    %1606 = vmatprep.subr.mxu0 0.0
    %1607 = vmatpush1.msra.mxu0 0.0
    %1608 = vmatprep.subr.mxu0 0.0
    %1609 = vmatpush1.msra.mxu0 0.0
    %1610 = vmatprep.subr.mxu0 0.0
    %1611 = vmatpush1.msra.mxu0 0.0
    %1612 = vmatprep.subr.mxu0 0.0
    %1613 = vmatpush1.msra.mxu0 0.0
    %1614 = vmatprep.subr.mxu0 0.0
    %1615 = vmatpush1.msra.mxu0 %v1576
    %1616 = vmatprep.subr.mxu0 0.0
    %1617 = vmatpush1.msra.mxu0 %v1575
    %1618 = vmatprep.subr.mxu0 0.0
    %1619 = vmatpush1.msra.mxu0 %v1574
    %1620 = vmatprep.subr.mxu0 0.0
    %1621 = vmatpush1.msra.mxu0 %v1573
    %1622 = vmatprep.subr.mxu0 0.0
    %1623 = vmatpush2.msra.mxu0 0.0
    %1624 = vmatprep.subr.mxu0 0.0
    %1625 = vmatpush2.msra.mxu0 0.0
    %1626 = vmatprep.subr.mxu0 0.0
    %1627 = vmatpush2.msra.mxu0 0.0
    %1628 = vmatprep.subr.mxu0 0.0
    %1629 = vmatpush2.msra.mxu0 0.0
    %1630 = vmatprep.subr.mxu0 0.0
    %1631 = vmatpush2.msra.mxu0 0.0
    %1632 = vmatprep.subr.mxu0 0.0
    %1633 = vmatpush2.msra.mxu0 0.0
    %1634 = vmatprep.subr.mxu0 0.0
    %1635 = vmatpush2.msra.mxu0 0.0
    %1636 = vmatprep.subr.mxu0 0.0
    %1637 = vmatpush2.msra.mxu0 0.0
    %1638 = vmatprep.subr.mxu0 0.0
    %1639 = vmatpush2.msra.mxu0 0.0
    %1640 = vmatprep.subr.mxu0 0.0
    %1641 = vmatpush2.msra.mxu0 0.0
    %1642 = vmatprep.subr.mxu0 0.0
    %1643 = vmatpush2.msra.mxu0 0.0
    %1644 = vmatprep.subr.mxu0 0.0
    %1645 = vmatpush2.msra.mxu0 0.0
    %1646 = vmatprep.subr.mxu0 0.0
    %1647 = vmatpush2.msra.mxu0 0.0
    %1648 = vmatprep.subr.mxu0 0.0
    %1649 = vmatpush2.msra.mxu0 0.0
    %1650 = vmatprep.subr.mxu0 0.0
    %1651 = vmatpush2.msra.mxu0 0.0
    %1652 = vmatprep.subr.mxu0 0.0
    %1653 = vmatpush2.msra.mxu0 0.0
    %1654 = vmatprep.mubr.f32.mxu0 0.0
    %1655 = vmatmul.mubr.f32.gmra.mxu0 %v1585
    %v1656 = vpop.f32.mrf.mxu0
    %v1657 = vadd.f32 %v1582, %v1656
    %v1658 = vpop.f32.mrf.mxu0
    %1659 = vmatprep.mubr.f32.mxu0 0.0
    %1660 = vmatmul.mubr.f32.gmra.mxu0 %v1588
    %v1661 = vpop.f32.mrf.mxu0
    %v1662 = vadd.f32 %v1582, %v1661
    %v1663 = vpop.f32.mrf.mxu0
    %1664 = vdwg.mxu0
    %v1665 = vadd.f32 %v1657, %v66
    %v1666 = vadd.f32 %v1662, %v67
    %v1667 = vld [vmem:[#allocation2] sm:$0xff]
    %v1668 = vsub.f32 %v1665, %v1667
    %v1669 = vmul.f32 %v1668, 0.5
    %v1670 = vadd.f32 %v1667, %v1669
    %vm1671 = vcmp.ge.f32.partialorder %v1670, 1.0
    %v1672 = vsel %vm1671, 1, 0
    %v1673 = vcvt.s32.f32 %v1672
    %vm1674 = vcmp.gt.f32.partialorder %v1673, 0.0
    %v1675 = vsel %vm1674, 0.0, %v1670
    %v1676 = vsub.f32 %v1666, %v1675
    %v1677 = vmul.f32 %v1676, 0.5
    %v1678 = vadd.f32 %v1675, %v1677
    %vm1679 = vcmp.ge.f32.partialorder %v1678, 1.0
    %v1680 = vsel %vm1679, 1, 0
    %v1681 = vcvt.s32.f32 %v1680
    %vm1682 = vcmp.gt.f32.partialorder %v1681, 0.0
    %v1683 = vsel %vm1682, 0.0, %v1678
    %1684 = vst.msk [vmem:[#allocation2] sm:$0xff] %vm70, %v1683
    %v1685 = vld [vmem:[%s7] sm:$0x1]
    %v1686 = vld [vmem:[%s8] sm:$0x1]
    %v1687 = vsel %vm70, %v1673, 0.0
    %1688 = vadd.xlane.f32.xlu0 %v1687
    %v1689 = vpop.xlane.xlu0 %1688
    %v1690 = vsel %vm70, %v1681, 0.0
    %1691 = vadd.xlane.f32.xlu0 %v1690
    %v1692 = vpop.xlane.xlu0 %1691
    %v1693 = vmul.f32 %v1689, %v77
    %v1694 = vmul.f32 %v1692, %v77
    %v1695 = vsub.f32 %v1673, %v1693
    %v1696 = vsub.f32 %v1681, %v1694
    %v1697 = vmul.f32 %v1695, %v1695
    %v1698 = vmul.f32 %v1696, %v1696
    %v1699 = vsel %vm70, %v1697, 0.0
    %1700 = vadd.xlane.f32.xlu0 %v1699
    %v1701 = vpop.xlane.xlu0 %1700
    %v1702 = vsel %vm70, %v1698, 0.0
    %1703 = vadd.xlane.f32.xlu0 %v1702
    %v1704 = vpop.xlane.xlu0 %1703
    %v1705 = vmul.f32 %v1701, %v77
    %v1706 = vmul.f32 %v1704, %v77
    %v1707 = vadd.f32 %v1705, 1e-05
    %v1708 = vadd.f32 %v1706, 1e-05
    %v1709 = vrsqrt.pop %v1707
    %v1710 = vrsqrt.pop %v1708
    %v1711 = vmul.f32 %v1695, %v1709
    %v1712 = vmul.f32 %v1696, %v1710
    %v1714 = vlaneseq
    %v1715 = vshrl.u32 %v1714, 7
    %v1716 = vsub.s32 0, %v1715
    %v1717 = vrot.slane %v1685, %v1716
    %v1719 = vmul.f32 %v1711, %v1717
    %v1720 = vmul.f32 %v1712, %v1717
    %v1722 = vlaneseq
    %v1723 = vshrl.u32 %v1722, 7
    %v1724 = vsub.s32 0, %v1723
    %v1725 = vrot.slane %v1686, %v1724
    %v1727 = vadd.f32 %v1719, %v1725
    %v1728 = vadd.f32 %v1720, %v1725
    %v1729 = vld [vmem:[%s9] sm:$0xff]
    %v1730 = vld [vmem:[%s9 + $0x8] sm:$0xff]
    %v1731 = vld [vmem:[%s9 + $0x10] sm:$0xff]
    %v1732 = vld [vmem:[%s9 + $0x18] sm:$0xff]
    %v1733 = vld [vmem:[%s10] sm:$0x1]
    %v1735 = vlaneseq
    %v1736 = vshrl.u32 %v1735, 7
    %v1737 = vsub.s32 0, %v1736
    %v1738 = vrot.slane %v1733, %v1737
    %v1741 = vsel %vm70, %v1727, 0
    %v1744 = vsel %vm70, %v1728, 0
    %1746 = vmatprep.subr.mxu0 0.0
    %1747 = vmatpush1.msra.mxu0 0.0
    %1748 = vmatprep.subr.mxu0 0.0
    %1749 = vmatpush1.msra.mxu0 0.0
    %1750 = vmatprep.subr.mxu0 0.0
    %1751 = vmatpush1.msra.mxu0 0.0
    %1752 = vmatprep.subr.mxu0 0.0
    %1753 = vmatpush1.msra.mxu0 0.0
    %1754 = vmatprep.subr.mxu0 0.0
    %1755 = vmatpush1.msra.mxu0 0.0
    %1756 = vmatprep.subr.mxu0 0.0
    %1757 = vmatpush1.msra.mxu0 0.0
    %1758 = vmatprep.subr.mxu0 0.0
    %1759 = vmatpush1.msra.mxu0 0.0
    %1760 = vmatprep.subr.mxu0 0.0
    %1761 = vmatpush1.msra.mxu0 0.0
    %1762 = vmatprep.subr.mxu0 0.0
    %1763 = vmatpush1.msra.mxu0 0.0
    %1764 = vmatprep.subr.mxu0 0.0
    %1765 = vmatpush1.msra.mxu0 0.0
    %1766 = vmatprep.subr.mxu0 0.0
    %1767 = vmatpush1.msra.mxu0 0.0
    %1768 = vmatprep.subr.mxu0 0.0
    %1769 = vmatpush1.msra.mxu0 0.0
    %1770 = vmatprep.subr.mxu0 0.0
    %1771 = vmatpush1.msra.mxu0 %v1732
    %1772 = vmatprep.subr.mxu0 0.0
    %1773 = vmatpush1.msra.mxu0 %v1731
    %1774 = vmatprep.subr.mxu0 0.0
    %1775 = vmatpush1.msra.mxu0 %v1730
    %1776 = vmatprep.subr.mxu0 0.0
    %1777 = vmatpush1.msra.mxu0 %v1729
    %1778 = vmatprep.subr.mxu0 0.0
    %1779 = vmatpush2.msra.mxu0 0.0
    %1780 = vmatprep.subr.mxu0 0.0
    %1781 = vmatpush2.msra.mxu0 0.0
    %1782 = vmatprep.subr.mxu0 0.0
    %1783 = vmatpush2.msra.mxu0 0.0
    %1784 = vmatprep.subr.mxu0 0.0
    %1785 = vmatpush2.msra.mxu0 0.0
    %1786 = vmatprep.subr.mxu0 0.0
    %1787 = vmatpush2.msra.mxu0 0.0
    %1788 = vmatprep.subr.mxu0 0.0
    %1789 = vmatpush2.msra.mxu0 0.0
    %1790 = vmatprep.subr.mxu0 0.0
    %1791 = vmatpush2.msra.mxu0 0.0
    %1792 = vmatprep.subr.mxu0 0.0
    %1793 = vmatpush2.msra.mxu0 0.0
    %1794 = vmatprep.subr.mxu0 0.0
    %1795 = vmatpush2.msra.mxu0 0.0
    %1796 = vmatprep.subr.mxu0 0.0
    %1797 = vmatpush2.msra.mxu0 0.0
    %1798 = vmatprep.subr.mxu0 0.0
    %1799 = vmatpush2.msra.mxu0 0.0
    %1800 = vmatprep.subr.mxu0 0.0
    %1801 = vmatpush2.msra.mxu0 0.0
    %1802 = vmatprep.subr.mxu0 0.0
    %1803 = vmatpush2.msra.mxu0 0.0
    %1804 = vmatprep.subr.mxu0 0.0
    %1805 = vmatpush2.msra.mxu0 0.0
    %1806 = vmatprep.subr.mxu0 0.0
    %1807 = vmatpush2.msra.mxu0 0.0
    %1808 = vmatprep.subr.mxu0 0.0
    %1809 = vmatpush2.msra.mxu0 0.0
    %1810 = vmatprep.mubr.f32.mxu0 0.0
    %1811 = vmatmul.mubr.f32.gmra.mxu0 %v1741
    %v1812 = vpop.f32.mrf.mxu0
    %v1813 = vadd.f32 %v1738, %v1812
    %v1814 = vpop.f32.mrf.mxu0
    %1815 = vmatprep.mubr.f32.mxu0 0.0
    %1816 = vmatmul.mubr.f32.gmra.mxu0 %v1744
    %v1817 = vpop.f32.mrf.mxu0
    %v1818 = vadd.f32 %v1738, %v1817
    %v1819 = vpop.f32.mrf.mxu0
    %1820 = vdwg.mxu0
    %v1821 = vmax.f32 %v1813, 0.0
    %v1822 = vmax.f32 %v1818, 0.0
    %v1823 = vld [vmem:[%s11] sm:$0xff]
    %v1824 = vld [vmem:[%s11 + $0x8] sm:$0xff]
    %v1825 = vld [vmem:[%s11 + $0x10] sm:$0xff]
    %v1826 = vld [vmem:[%s11 + $0x18] sm:$0xff]
    %v1827 = vld [vmem:[%s11 + $0x20] sm:$0xff]
    %v1828 = vld [vmem:[%s11 + $0x28] sm:$0xff]
    %v1829 = vld [vmem:[%s11 + $0x30] sm:$0xff]
    %v1830 = vld [vmem:[%s11 + $0x38] sm:$0xff]
    %v1831 = vld [vmem:[%s12] sm:$0x1]
    %v1833 = vlaneseq
    %v1834 = vshrl.u32 %v1833, 7
    %v1835 = vsub.s32 0, %v1834
    %v1836 = vrot.slane %v1831, %v1835
    %vm1838 = vcmask 523264
    %v1840 = vsel %vm1838, %v1821, 0
    %v1843 = vsel %vm1838, %v1822, 0
    %1845 = vmatprep.subr.mxu0 0.0
    %1846 = vmatpush1.msra.mxu0 0.0
    %1847 = vmatprep.subr.mxu0 0.0
    %1848 = vmatpush1.msra.mxu0 0.0
    %1849 = vmatprep.subr.mxu0 0.0
    %1850 = vmatpush1.msra.mxu0 0.0
    %1851 = vmatprep.subr.mxu0 0.0
    %1852 = vmatpush1.msra.mxu0 0.0
    %1853 = vmatprep.subr.mxu0 0.0
    %1854 = vmatpush1.msra.mxu0 0.0
    %1855 = vmatprep.subr.mxu0 0.0
    %1856 = vmatpush1.msra.mxu0 0.0
    %1857 = vmatprep.subr.mxu0 0.0
    %1858 = vmatpush1.msra.mxu0 0.0
    %1859 = vmatprep.subr.mxu0 0.0
    %1860 = vmatpush1.msra.mxu0 0.0
    %1861 = vmatprep.subr.mxu0 0.0
    %1862 = vmatpush1.msra.mxu0 %v1830
    %1863 = vmatprep.subr.mxu0 0.0
    %1864 = vmatpush1.msra.mxu0 %v1829
    %1865 = vmatprep.subr.mxu0 0.0
    %1866 = vmatpush1.msra.mxu0 %v1828
    %1867 = vmatprep.subr.mxu0 0.0
    %1868 = vmatpush1.msra.mxu0 %v1827
    %1869 = vmatprep.subr.mxu0 0.0
    %1870 = vmatpush1.msra.mxu0 %v1826
    %1871 = vmatprep.subr.mxu0 0.0
    %1872 = vmatpush1.msra.mxu0 %v1825
    %1873 = vmatprep.subr.mxu0 0.0
    %1874 = vmatpush1.msra.mxu0 %v1824
    %1875 = vmatprep.subr.mxu0 0.0
    %1876 = vmatpush1.msra.mxu0 %v1823
    %1877 = vmatprep.subr.mxu0 0.0
    %1878 = vmatpush2.msra.mxu0 0.0
    %1879 = vmatprep.subr.mxu0 0.0
    %1880 = vmatpush2.msra.mxu0 0.0
    %1881 = vmatprep.subr.mxu0 0.0
    %1882 = vmatpush2.msra.mxu0 0.0
    %1883 = vmatprep.subr.mxu0 0.0
    %1884 = vmatpush2.msra.mxu0 0.0
    %1885 = vmatprep.subr.mxu0 0.0
    %1886 = vmatpush2.msra.mxu0 0.0
    %1887 = vmatprep.subr.mxu0 0.0
    %1888 = vmatpush2.msra.mxu0 0.0
    %1889 = vmatprep.subr.mxu0 0.0
    %1890 = vmatpush2.msra.mxu0 0.0
    %1891 = vmatprep.subr.mxu0 0.0
    %1892 = vmatpush2.msra.mxu0 0.0
    %1893 = vmatprep.subr.mxu0 0.0
    %1894 = vmatpush2.msra.mxu0 0.0
    %1895 = vmatprep.subr.mxu0 0.0
    %1896 = vmatpush2.msra.mxu0 0.0
    %1897 = vmatprep.subr.mxu0 0.0
    %1898 = vmatpush2.msra.mxu0 0.0
    %1899 = vmatprep.subr.mxu0 0.0
    %1900 = vmatpush2.msra.mxu0 0.0
    %1901 = vmatprep.subr.mxu0 0.0
    %1902 = vmatpush2.msra.mxu0 0.0
    %1903 = vmatprep.subr.mxu0 0.0
    %1904 = vmatpush2.msra.mxu0 0.0
    %1905 = vmatprep.subr.mxu0 0.0
    %1906 = vmatpush2.msra.mxu0 0.0
    %1907 = vmatprep.subr.mxu0 0.0
    %1908 = vmatpush2.msra.mxu0 0.0
    %1909 = vmatprep.mubr.f32.mxu0 0.0
    %1910 = vmatmul.mubr.f32.gmra.mxu0 %v1840
    %v1911 = vpop.f32.mrf.mxu0
    %v1912 = vadd.f32 %v1836, %v1911
    %v1913 = vpop.f32.mrf.mxu0
    %1914 = vmatprep.mubr.f32.mxu0 0.0
    %1915 = vmatmul.mubr.f32.gmra.mxu0 %v1843
    %v1916 = vpop.f32.mrf.mxu0
    %v1917 = vadd.f32 %v1836, %v1916
    %v1918 = vpop.f32.mrf.mxu0
    %1919 = vdwg.mxu0
    %v1920 = vadd.f32 %v1912, %v1673
    %v1921 = vadd.f32 %v1917, %v1681
    %v1922 = vld [vmem:[#allocation3] sm:$0xff]
    %v1923 = vsub.f32 %v1920, %v1922
    %v1924 = vmul.f32 %v1923, 0.5
    %v1925 = vadd.f32 %v1922, %v1924
    %vm1926 = vcmp.ge.f32.partialorder %v1925, 1.0
    %v1927 = vsel %vm1926, 1, 0
    %v1928 = vcvt.s32.f32 %v1927
    %vm1929 = vcmp.gt.f32.partialorder %v1928, 0.0
    %v1930 = vsel %vm1929, 0.0, %v1925
    %v1931 = vsub.f32 %v1921, %v1930
    %v1932 = vmul.f32 %v1931, 0.5
    %v1933 = vadd.f32 %v1930, %v1932
    %vm1934 = vcmp.ge.f32.partialorder %v1933, 1.0
    %v1935 = vsel %vm1934, 1, 0
    %v1936 = vcvt.s32.f32 %v1935
    %vm1937 = vcmp.gt.f32.partialorder %v1936, 0.0
    %v1938 = vsel %vm1937, 0.0, %v1933
    %1939 = vst.msk [vmem:[#allocation3] sm:$0xff] %vm70, %v1938
    %1940 = vst.msk [vmem:[#allocation7] sm:$0xff] %vm70, %v1928
    %1941 = vst.msk [vmem:[#allocation7 + $0x8] sm:$0xff] %vm70, %v1936
    // Predicated region
    $region62: #{tpu_custom_call.1} parent=1 // pred_check
      _
    $region63: #{tpu_custom_call.1} parent=1 // pred_check_branch
      %1943 = sbr.rel (0) target = $region65
    $region64: #{tpu_custom_call.1} parent=1 // pred_region
      %s1945 = ssub.s32 256, 256
      %1946 = vsyncadd [#allocation6], %s1945
      %s1947 = sshll.u32 [#allocation7], 4
      %s1948 = int_to_ptr.vmem [resolvable:$true] %s1947
      %1953 = dma.vmem_to_hbm [thread:$0]  %s1948, 256, %s13, [#allocation6], 128, 128, 8
    $region65: #{tpu_custom_call.1} parent=1 // pred_fallthru
      _
    // Predicated region
    $region66: #{tpu_custom_call.1} parent=1 // pred_check
      _
    $region67: #{tpu_custom_call.1} parent=1 // pred_check_branch
      %1955 = sbr.rel (0) target = $region69
    $region68: #{tpu_custom_call.1} parent=1 // pred_region
      %1956 = dma.done [#allocation6], 256
    $region69: #{tpu_custom_call.1} parent=1 // pred_fallthru
      _
    %1957 = vsyncpa [#allocation5], 1
    %1958 = vsyncpa [#allocation6], 1

</llo_original>
